<compile_context>
chip_gen: v6e
topology: v6e:2x2x1
jax: 0.10.0
libtpu: 0.0.40
codegen_flags: <defaults>
</compile_context>

<pallas_src>
import functools

import jax
import jax.numpy as jnp
from jax.experimental import pallas as pl
from jax.experimental.pallas import tpu as pltpu

_SE_PAD = 128  # lane-dense width of the fused start/end logits slab


def _ner_heads_kernel(hi_ref, hj_ref, wse_ref, bse_ref,
                      w1a_ref, w1b_ref, b1_ref, w2_ref, b2_ref,
                      se_ref, span_ref, a_scr,
                      *, compute_dtype, hk):
    """One grid step == one (batch, i-tile, j-tile) span tile.

    hi_ref : (1, ti, H)  rows i of sequence_heatmap
    hj_ref : (1, tj, H)  rows j of sequence_heatmap
    wse_ref: (H, 128)    [Ws | We | 0-pad]   fused start/end classifier
    bse_ref: (1, 128)    [bs | be | 0-pad]
    w1a/w1b: (H, Hh)     split of span classifier1 (concat([h_i,h_j])@W1 == h_i@W1a + h_j@W1b)
    b1     : (1, Hh)     w2: (1, Hh)     b2: (1, 1) SMEM scalar
    se_ref : (1, ti, 128) lane-padded start/end logits slab (written once per (b, i))
    span_ref: (1, ti, tj) span logits tile
    a_scr  : (ti, Hh) f32 VMEM scratch
    """
    j = pl.program_id(2)
    cdt = compute_dtype

    # --- fused start/end classifier: one MXU push + one lane-dense 128-wide store.
    #     The se output block is resident across the j axis, so write it only at j == 0. ---
    @pl.when(j == 0)
    def _():
        se = jnp.dot(hi_ref[0], wse_ref[...], preferred_element_type=jnp.float32)
        se_ref[0] = se + bse_ref[...]

    # --- span MLP, row-streamed; the (ti, tj, Hh) intermediate is never materialized. ---
    a = jnp.dot(hi_ref[0].astype(cdt), w1a_ref[...].astype(cdt),
                preferred_element_type=jnp.float32) + b1_ref[...]          # (ti, Hh) f32
    a_scr[...] = a
    bm = jnp.dot(hj_ref[0].astype(cdt), w1b_ref[...].astype(cdt),
                 preferred_element_type=jnp.float32).astype(cdt)           # (tj, Hh)

    tj, hh = bm.shape
    ti = a_scr.shape[0]
    nk = hh // hk
    b2 = b2_ref[0, 0]
    # Hoist the w2 broadcast out of the row loop (JAX does not CSE broadcast_in_dim).
    w2b = jnp.broadcast_to(w2_ref[...], (tj, hh)).astype(cdt)              # (tj, Hh)

    def row_body(r, carry):
        a_r = a_scr[pl.ds(r, 1), :].astype(cdt)                            # (1, Hh)
        acc = jnp.zeros((tj,), jnp.float32)
        for kc in range(nk):                                               # static Hh lane-chunks
            sl = slice(kc * hk, (kc + 1) * hk)
            x = jnp.maximum(bm[:, sl] + a_r[:, sl], 0.0)                   # (tj, hk)  VPU
            acc = acc + jnp.sum((x * w2b[:, sl]).astype(jnp.float32), axis=-1)  # XLU, f32 acc
        span_ref[0, pl.ds(r, 1), :] = (acc + b2)[None, :]                  # lane-dense row store
        return carry

    jax.lax.fori_loop(0, ti, row_body, 0, unroll=min(8, ti))


def run_ner_heads(seq_out, params, *, compute_dtype=jnp.float32, ti=None, tj=None):
    """Returns raw (start_logits, end_logits, span_logits): (B,S,2), (B,S,2), (B,S,S)."""
    B, S, H = seq_out.shape
    Hh = params["W1"].shape[1]                       # = hidden_size

    # Tile sizes: full S for small demos, 128 (lane-dense) otherwise.
    if ti is None:
        ti = S if S <= 128 else 128
    if tj is None:
        tj = S if S <= 128 else 128
    assert S % ti == 0 and S % tj == 0, "seq_len must be divisible by the span tile sizes"

    # Fused, lane-padded start/end classifier: cols [0:2]=Ws, [2:4]=We, rest zero.
    w_se = jnp.pad(jnp.concatenate([params["Ws"], params["We"]], axis=1),
                   ((0, 0), (0, _SE_PAD - 4)))
    b_se = jnp.pad(jnp.concatenate([params["bs"], params["be"]], axis=1),
                   ((0, 0), (0, _SE_PAD - 4)))

    # Split span classifier1 so concat([h_i, h_j]) @ W1 == h_i @ W1a + h_j @ W1b.
    w1a, w1b = params["W1"][:H], params["W1"][H:]
    b1 = params["b1"]                                # (1, Hh)
    w2 = params["W2"].reshape(1, Hh)                 # row layout for lane broadcast
    b2 = params["b2"].reshape(1, 1)                  # SMEM scalar

    hk = 128 if Hh % 128 == 0 else Hh                # lane-chunk of the Hh reduce

    kernel = functools.partial(_ner_heads_kernel, compute_dtype=compute_dtype, hk=hk)
    full = lambda arr: pl.BlockSpec(arr.shape, lambda b, i, j: (0,) * arr.ndim)

    se_slab, span_logits = pl.pallas_call(
        kernel,
        grid=(B, S // ti, S // tj),
        in_specs=[
            pl.BlockSpec((1, ti, H), lambda b, i, j: (b, i, 0)),     # h rows for the i tile
            pl.BlockSpec((1, tj, H), lambda b, i, j: (b, j, 0)),     # h rows for the j tile
            full(w_se), full(b_se),
            full(w1a), full(w1b), full(b1), full(w2),
            pl.BlockSpec(memory_space=pltpu.MemorySpace.SMEM),       # b2 scalar
        ],
        out_specs=[
            pl.BlockSpec((1, ti, _SE_PAD), lambda b, i, j: (b, i, 0)),
            pl.BlockSpec((1, ti, tj), lambda b, i, j: (b, i, j)),
        ],
        out_shape=[
            jax.ShapeDtypeStruct((B, S, _SE_PAD), jnp.float32),
            jax.ShapeDtypeStruct((B, S, S), jnp.float32),
        ],
        scratch_shapes=[pltpu.VMEM((ti, Hh), jnp.float32)],
        compiler_params=pltpu.CompilerParams(
            dimension_semantics=("parallel", "parallel", "arbitrary"),
            vmem_limit_bytes=48 * 1024 * 1024,       # headroom on v7x (64 MiB physical VMEM)
        ),
    )(seq_out, seq_out, w_se, b_se, w1a, w1b, b1, w2, b2)

    return se_slab[:, :, 0:2], se_slab[:, :, 2:4], span_logits


def bert_query_ner_forward(seq_out, params,
                           start_positions=None, end_positions=None, span_positions=None,
                           weight_start=1.0, weight_end=1.0, weight_span=1.0,
                           alpha=0.25, gamma=2.0, compute_dtype=jnp.float32):
    """Mirrors BertQueryNER.forward given the encoder output `seq_out` (B, S, H)."""
    start_logits, end_logits, span_logits = run_ner_heads(
        seq_out, params, compute_dtype=compute_dtype)

    if start_positions is not None and end_positions is not None:
        # CrossEntropyLoss (mean) over 2 classes.
        def ce(logits2, labels):
            l = logits2.reshape(-1, 2)
            y = labels.reshape(-1)
            lse = jax.nn.logsumexp(l, axis=-1)
            picked = jnp.take_along_axis(l, y[:, None], axis=-1)[:, 0]
            return jnp.mean(lse - picked)

        start_loss = ce(start_logits, start_positions)
        end_loss = ce(end_logits, end_positions)

        # Focal_Loss: sigmoid BCE weighted by alpha * focal_weight**gamma.
        # log(sigmoid) / log(1-sigmoid) evaluated in logits space for numerical stability.
        x = span_logits.reshape(-1)
        pred = jax.nn.sigmoid(x)
        target = span_positions.reshape(-1).astype(jnp.float32)
        alpha_factor = jnp.where(target == 1, 1.0 - alpha, alpha)
        focal_weight = jnp.where(target == 1, 1.0 - pred, pred)
        final_weight = alpha_factor * jnp.power(focal_weight, gamma)
        bce = -(target * jax.nn.log_sigmoid(x) + (1.0 - target) * jax.nn.log_sigmoid(-x))
        span_loss = jnp.mean(final_weight * bce)

        return weight_start * start_loss + weight_end * end_loss + weight_span * span_loss
    else:
        span_prob = jax.nn.sigmoid(span_logits)           # torch.sigmoid(span_logits)
        start_pred = jnp.argmax(start_logits, axis=-1)    # torch.argmax(..., dim=-1)
        end_pred = jnp.argmax(end_logits, axis=-1)
        return start_pred, end_pred, span_prob


def init_params(key, hidden_size):
    """Deterministic nn.Linear-style init: U(-1/sqrt(fan_in), 1/sqrt(fan_in))."""
    H = hidden_size
    ks = jax.random.split(key, 8)

    def lin(kw, kb, fan_in, fan_out):
        bound = 1.0 / jnp.sqrt(float(fan_in))
        w = jax.random.uniform(kw, (fan_in, fan_out), jnp.float32, -bound, bound)
        b = jax.random.uniform(kb, (1, fan_out), jnp.float32, -bound, bound)
        return w, b

    Ws, bs = lin(ks[0], ks[1], H, 2)          # start_outputs
    We, be = lin(ks[2], ks[3], H, 2)          # end_outputs
    W1, b1 = lin(ks[4], ks[5], 2 * H, H)      # span_embedding.classifier1 (2H -> H)
    W2, b2 = lin(ks[6], ks[7], H, 1)          # span_embedding.classifier2 (H -> 1)
    return {"Ws": Ws, "bs": bs, "We": We, "be": be, "W1": W1, "b1": b1, "W2": W2, "b2": b2}


def _ner_heads_reference(seq_out, params):
    """Pure-JAX reference matching the PyTorch math (materializes the pairwise tensor)."""
    h = seq_out
    B, S, H = h.shape
    start = h @ params["Ws"] + params["bs"]
    end = h @ params["We"] + params["be"]
    hi = jnp.broadcast_to(h[:, :, None, :], (B, S, S, H))
    hj = jnp.broadcast_to(h[:, None, :, :], (B, S, S, H))
    mid = jnp.maximum(jnp.concatenate([hi, hj], axis=-1) @ params["W1"] + params["b1"], 0.0)
    span = (mid @ params["W2"] + params["b2"])[..., 0]
    return start, end, span


if __name__ == "__main__":
    B, S, H = 2, 8, 32
    key = jax.random.PRNGKey(0)
    k_seq, k_par, k_s, k_e, k_sp = jax.random.split(key, 5)

    # Synthetic deterministic stand-in for bert(...).last_hidden_state
    seq_out = jax.random.normal(k_seq, (B, S, H), jnp.float32)
    params = init_params(k_par, H)

    # Kernel vs pure-JAX reference (f32 compute path).
    s_k, e_k, sp_k = run_ner_heads(seq_out, params)
    s_r, e_r, sp_r = _ner_heads_reference(seq_out, params)
    jax.block_until_ready((s_k, e_k, sp_k))
    assert jnp.allclose(s_k, s_r, atol=2e-2, rtol=2e-2)
    assert jnp.allclose(e_k, e_r, atol=2e-2, rtol=2e-2)
    assert jnp.allclose(sp_k, sp_r, atol=2e-2, rtol=2e-2)

    # bf16 pairwise-compute path (recommended on v6e/v7x), f32 accumulation.
    _, _, sp_bf16 = run_ner_heads(seq_out, params, compute_dtype=jnp.bfloat16)
    jax.block_until_ready(sp_bf16)
    assert float(jnp.max(jnp.abs(sp_bf16 - sp_r))) < 1.5e-1

    # Inference branch (start/end/span predictions).
    start_pred, end_pred, span_prob = bert_query_ner_forward(seq_out, params)
    jax.block_until_ready((start_pred, end_pred, span_prob))
    assert start_pred.shape == (B, S) and end_pred.shape == (B, S) and span_prob.shape == (B, S, S)

    # Training branch (weighted total loss).
    start_pos = jax.random.bernoulli(k_s, 0.3, (B, S)).astype(jnp.int32)
    end_pos = jax.random.bernoulli(k_e, 0.3, (B, S)).astype(jnp.int32)
    span_pos = jax.random.bernoulli(k_sp, 0.1, (B, S, S)).astype(jnp.int32)
    total_loss = bert_query_ner_forward(seq_out, params, start_pos, end_pos, span_pos,
                                        weight_start=1.0, weight_end=1.0, weight_span=1.0)
    jax.block_until_ready(total_loss)
    assert bool(jnp.isfinite(total_loss))

    print("KERNEL_OK")
</pallas_src>

<mosaic_0001>
module attributes {stable_mosaic.version = 11 : i64} {
  func.func @_ner_heads_kernel(%arg0: i32, %arg1: i32, %arg2: i32, %arg3: memref<1x8x32xf32, #tpu.memory_space<vmem>>, %arg4: memref<1x8x32xf32, #tpu.memory_space<vmem>>, %arg5: memref<32x128xf32, #tpu.memory_space<vmem>>, %arg6: memref<1x128xf32, #tpu.memory_space<vmem>>, %arg7: memref<32x32xf32, #tpu.memory_space<vmem>>, %arg8: memref<32x32xf32, #tpu.memory_space<vmem>>, %arg9: memref<1x32xf32, #tpu.memory_space<vmem>>, %arg10: memref<1x32xf32, #tpu.memory_space<vmem>>, %arg11: memref<1x1xf32, #tpu.memory_space<smem>>, %arg12: memref<1x8x128xf32, #tpu.memory_space<vmem>>, %arg13: memref<1x8x8xf32, #tpu.memory_space<vmem>>, %arg14: memref<8x32xf32, #tpu.memory_space<vmem>>) attributes {dimension_semantics = [#tpu.dimension_semantics<parallel>, #tpu.dimension_semantics<parallel>, #tpu.dimension_semantics<arbitrary>], iteration_bounds = array<i64: 2, 1, 1>, scalar_prefetch = 0 : i64, scratch_operands = 1 : i64, tpu.core_type = #tpu.core_type<tc>, window_params = [{transform_indices = @transform_0, window_bounds = array<i64: 1, 8, 32>}, {transform_indices = @transform_1, window_bounds = array<i64: 1, 8, 32>}, {pipeline_mode = #tpu.pipeline_mode<synchronous>, transform_indices = @transform_2, window_bounds = array<i64: 32, 128>}, {pipeline_mode = #tpu.pipeline_mode<synchronous>, transform_indices = @transform_3, window_bounds = array<i64: 1, 128>}, {pipeline_mode = #tpu.pipeline_mode<synchronous>, transform_indices = @transform_4, window_bounds = array<i64: 32, 32>}, {pipeline_mode = #tpu.pipeline_mode<synchronous>, transform_indices = @transform_5, window_bounds = array<i64: 32, 32>}, {pipeline_mode = #tpu.pipeline_mode<synchronous>, transform_indices = @transform_6, window_bounds = array<i64: 1, 32>}, {pipeline_mode = #tpu.pipeline_mode<synchronous>, transform_indices = @transform_7, window_bounds = array<i64: 1, 32>}, {transform_indices = @transform_8, window_bounds = array<i64: 1, 1>}, {transform_indices = @transform_9, window_bounds = array<i64: 1, 8, 128>}, {transform_indices = @transform_10, window_bounds = array<i64: 1, 8, 8>}]} {
    %c0_i32 = arith.constant 0 : i32
    %0 = arith.cmpi eq, %arg2, %c0_i32 : i32
    %1 = arith.extui %0 : i1 to i32
    %c0_i32_0 = arith.constant 0 : i32
    %2 = arith.cmpi ne, %1, %c0_i32_0 : i32
    scf.if %2 {
      %c0_68 = arith.constant 0 : index
      %c0_69 = arith.constant 0 : index
      %c0_70 = arith.constant 0 : index
      %155 = vector.load %arg3[%c0_68, %c0_69, %c0_70] : memref<1x8x32xf32, #tpu.memory_space<vmem>>, vector<1x8x32xf32>
      %156 = vector.shape_cast %155 : vector<1x8x32xf32> to vector<8x32xf32>
      %c0_71 = arith.constant 0 : index
      %c0_72 = arith.constant 0 : index
      %157 = vector.load %arg5[%c0_71, %c0_72] : memref<32x128xf32, #tpu.memory_space<vmem>>, vector<32x128xf32>
      %cst_73 = arith.constant dense<0.000000e+00> : vector<8x128xf32>
      %158 = tpu.matmul %156, %157, %cst_73 {dimension_numbers = #tpu.dot_dimension_numbers<[1], [0], [0], [1], [0, 0, 1, 1], [], []>} : vector<8x32xf32>, vector<32x128xf32>, vector<8x128xf32> -> vector<8x128xf32>
      %c0_74 = arith.constant 0 : index
      %c0_75 = arith.constant 0 : index
      %159 = vector.load %arg6[%c0_74, %c0_75] : memref<1x128xf32, #tpu.memory_space<vmem>>, vector<1x128xf32>
      %160 = vector.broadcast %159 : vector<1x128xf32> to vector<8x128xf32>
      %161 = arith.addf %158, %160 : vector<8x128xf32>
      %c0_76 = arith.constant 0 : index
      %c0_77 = arith.constant 0 : index
      %c0_78 = arith.constant 0 : index
      %162 = vector.load %arg12[%c0_76, %c0_77, %c0_78] : memref<1x8x128xf32, #tpu.memory_space<vmem>>, vector<1x8x128xf32>
      %163 = vector.shape_cast %162 : vector<1x8x128xf32> to vector<8x128xf32>
      %164 = vector.shape_cast %161 : vector<8x128xf32> to vector<1x8x128xf32>
      tpu.vector_store %arg12[%c0_76, %c0_77, %c0_78], %164 {strides = array<i32>} : memref<1x8x128xf32, #tpu.memory_space<vmem>>, vector<1x8x128xf32>,
    } else {
    }
    %c0 = arith.constant 0 : index
    %c0_1 = arith.constant 0 : index
    %c0_2 = arith.constant 0 : index
    %3 = vector.load %arg3[%c0, %c0_1, %c0_2] : memref<1x8x32xf32, #tpu.memory_space<vmem>>, vector<1x8x32xf32>
    %4 = vector.shape_cast %3 : vector<1x8x32xf32> to vector<8x32xf32>
    %c0_3 = arith.constant 0 : index
    %c0_4 = arith.constant 0 : index
    %5 = vector.load %arg7[%c0_3, %c0_4] : memref<32x32xf32, #tpu.memory_space<vmem>>, vector<32x32xf32>
    %cst = arith.constant dense<0.000000e+00> : vector<8x32xf32>
    %6 = tpu.matmul %4, %5, %cst {dimension_numbers = #tpu.dot_dimension_numbers<[1], [0], [0], [1], [0, 0, 1, 1], [], []>} : vector<8x32xf32>, vector<32x32xf32>, vector<8x32xf32> -> vector<8x32xf32>
    %c0_5 = arith.constant 0 : index
    %c0_6 = arith.constant 0 : index
    %7 = vector.load %arg9[%c0_5, %c0_6] : memref<1x32xf32, #tpu.memory_space<vmem>>, vector<1x32xf32>
    %8 = vector.broadcast %7 : vector<1x32xf32> to vector<8x32xf32>
    %9 = arith.addf %6, %8 : vector<8x32xf32>
    %c0_7 = arith.constant 0 : index
    %c0_8 = arith.constant 0 : index
    %10 = vector.load %arg14[%c0_7, %c0_8] : memref<8x32xf32, #tpu.memory_space<vmem>>, vector<8x32xf32>
    tpu.vector_store %arg14[%c0_7, %c0_8], %9 {strides = array<i32>} : memref<8x32xf32, #tpu.memory_space<vmem>>, vector<8x32xf32>,
    %c0_9 = arith.constant 0 : index
    %c0_10 = arith.constant 0 : index
    %c0_11 = arith.constant 0 : index
    %11 = vector.load %arg4[%c0_9, %c0_10, %c0_11] : memref<1x8x32xf32, #tpu.memory_space<vmem>>, vector<1x8x32xf32>
    %12 = vector.shape_cast %11 : vector<1x8x32xf32> to vector<8x32xf32>
    %c0_12 = arith.constant 0 : index
    %c0_13 = arith.constant 0 : index
    %13 = vector.load %arg8[%c0_12, %c0_13] : memref<32x32xf32, #tpu.memory_space<vmem>>, vector<32x32xf32>
    %cst_14 = arith.constant dense<0.000000e+00> : vector<8x32xf32>
    %14 = tpu.matmul %12, %13, %cst_14 {dimension_numbers = #tpu.dot_dimension_numbers<[1], [0], [0], [1], [0, 0, 1, 1], [], []>} : vector<8x32xf32>, vector<32x32xf32>, vector<8x32xf32> -> vector<8x32xf32>
    %c0_15 = arith.constant 0 : index
    %c0_16 = arith.constant 0 : index
    %15 = memref.load %arg11[%c0_15, %c0_16] : memref<1x1xf32, #tpu.memory_space<smem>>
    %c0_17 = arith.constant 0 : index
    %c0_18 = arith.constant 0 : index
    %16 = vector.load %arg10[%c0_17, %c0_18] : memref<1x32xf32, #tpu.memory_space<vmem>>, vector<1x32xf32>
    %17 = vector.shape_cast %16 : vector<1x32xf32> to vector<1x32xf32>
    %18 = vector.broadcast %17 : vector<1x32xf32> to vector<8x32xf32>
    %c0_i32_19 = arith.constant 0 : i32
    %19 = arith.index_cast %c0_i32_19 : i32 to index
    %c0_20 = arith.constant 0 : index
    %20 = vector.load %arg14[%19, %c0_20] : memref<8x32xf32, #tpu.memory_space<vmem>>, vector<1x32xf32>
    %cst_21 = arith.constant 0.000000e+00 : f32
    %21 = vector.broadcast %cst_21 : f32 to vector<8xf32>
    %22 = vector.broadcast %20 : vector<1x32xf32> to vector<8x32xf32>
    %23 = arith.addf %14, %22 : vector<8x32xf32>
    %cst_22 = arith.constant 0.000000e+00 : f32
    %24 = vector.broadcast %cst_22 : f32 to vector<8x32xf32>
    %25 = arith.maximumf %23, %24 : vector<8x32xf32>
    %26 = arith.mulf %25, %18 : vector<8x32xf32>
    %cst_23 = arith.constant dense<0.000000e+00> : vector<8xf32>
    %27 = vector.multi_reduction <add>, %26, %cst_23 [1] : vector<8x32xf32> to vector<8xf32>
    %28 = arith.addf %21, %27 : vector<8xf32>
    %29 = vector.broadcast %15 : f32 to vector<8xf32>
    %30 = arith.addf %28, %29 : vector<8xf32>
    %31 = vector.shape_cast %30 : vector<8xf32> to vector<1x8xf32>
    %c0_24 = arith.constant 0 : index
    %32 = arith.index_cast %c0_i32_19 : i32 to index
    %c0_25 = arith.constant 0 : index
    %33 = vector.load %arg13[%c0_24, %32, %c0_25] : memref<1x8x8xf32, #tpu.memory_space<vmem>>, vector<1x1x8xf32>
    %34 = vector.shape_cast %33 : vector<1x1x8xf32> to vector<1x8xf32>
    %35 = vector.shape_cast %31 : vector<1x8xf32> to vector<1x1x8xf32>
    tpu.vector_store %arg13[%c0_24, %32, %c0_25], %35 {strides = array<i32>} : memref<1x8x8xf32, #tpu.memory_space<vmem>>, vector<1x1x8xf32>,
    %c1_i32 = arith.constant 1 : i32
    %36 = arith.index_cast %c1_i32 : i32 to index
    %c0_26 = arith.constant 0 : index
    %37 = vector.load %arg14[%36, %c0_26] : memref<8x32xf32, #tpu.memory_space<vmem>>, vector<1x32xf32>
    %cst_27 = arith.constant 0.000000e+00 : f32
    %38 = vector.broadcast %cst_27 : f32 to vector<8xf32>
    %39 = vector.broadcast %37 : vector<1x32xf32> to vector<8x32xf32>
    %40 = arith.addf %14, %39 : vector<8x32xf32>
    %cst_28 = arith.constant 0.000000e+00 : f32
    %41 = vector.broadcast %cst_28 : f32 to vector<8x32xf32>
    %42 = arith.maximumf %40, %41 : vector<8x32xf32>
    %43 = arith.mulf %42, %18 : vector<8x32xf32>
    %cst_29 = arith.constant dense<0.000000e+00> : vector<8xf32>
    %44 = vector.multi_reduction <add>, %43, %cst_29 [1] : vector<8x32xf32> to vector<8xf32>
    %45 = arith.addf %38, %44 : vector<8xf32>
    %46 = vector.broadcast %15 : f32 to vector<8xf32>
    %47 = arith.addf %45, %46 : vector<8xf32>
    %48 = vector.shape_cast %47 : vector<8xf32> to vector<1x8xf32>
    %c0_30 = arith.constant 0 : index
    %49 = arith.index_cast %c1_i32 : i32 to index
    %c0_31 = arith.constant 0 : index
    %50 = vector.load %arg13[%c0_30, %49, %c0_31] : memref<1x8x8xf32, #tpu.memory_space<vmem>>, vector<1x1x8xf32>
    %51 = vector.shape_cast %50 : vector<1x1x8xf32> to vector<1x8xf32>
    %52 = vector.shape_cast %48 : vector<1x8xf32> to vector<1x1x8xf32>
    tpu.vector_store %arg13[%c0_30, %49, %c0_31], %52 {strides = array<i32>} : memref<1x8x8xf32, #tpu.memory_space<vmem>>, vector<1x1x8xf32>,
    %c2_i32 = arith.constant 2 : i32
    %53 = arith.index_cast %c2_i32 : i32 to index
    %c0_32 = arith.constant 0 : index
    %54 = vector.load %arg14[%53, %c0_32] : memref<8x32xf32, #tpu.memory_space<vmem>>, vector<1x32xf32>
    %cst_33 = arith.constant 0.000000e+00 : f32
    %55 = vector.broadcast %cst_33 : f32 to vector<8xf32>
    %56 = vector.broadcast %54 : vector<1x32xf32> to vector<8x32xf32>
    %57 = arith.addf %14, %56 : vector<8x32xf32>
    %cst_34 = arith.constant 0.000000e+00 : f32
    %58 = vector.broadcast %cst_34 : f32 to vector<8x32xf32>
    %59 = arith.maximumf %57, %58 : vector<8x32xf32>
    %60 = arith.mulf %59, %18 : vector<8x32xf32>
    %cst_35 = arith.constant dense<0.000000e+00> : vector<8xf32>
    %61 = vector.multi_reduction <add>, %60, %cst_35 [1] : vector<8x32xf32> to vector<8xf32>
    %62 = arith.addf %55, %61 : vector<8xf32>
    %63 = vector.broadcast %15 : f32 to vector<8xf32>
    %64 = arith.addf %62, %63 : vector<8xf32>
    %65 = vector.shape_cast %64 : vector<8xf32> to vector<1x8xf32>
    %c0_36 = arith.constant 0 : index
    %66 = arith.index_cast %c2_i32 : i32 to index
    %c0_37 = arith.constant 0 : index
    %67 = vector.load %arg13[%c0_36, %66, %c0_37] : memref<1x8x8xf32, #tpu.memory_space<vmem>>, vector<1x1x8xf32>
    %68 = vector.shape_cast %67 : vector<1x1x8xf32> to vector<1x8xf32>
    %69 = vector.shape_cast %65 : vector<1x8xf32> to vector<1x1x8xf32>
    tpu.vector_store %arg13[%c0_36, %66, %c0_37], %69 {strides = array<i32>} : memref<1x8x8xf32, #tpu.memory_space<vmem>>, vector<1x1x8xf32>,
    %c3_i32 = arith.constant 3 : i32
    %70 = arith.index_cast %c3_i32 : i32 to index
    %c0_38 = arith.constant 0 : index
    %71 = vector.load %arg14[%70, %c0_38] : memref<8x32xf32, #tpu.memory_space<vmem>>, vector<1x32xf32>
    %cst_39 = arith.constant 0.000000e+00 : f32
    %72 = vector.broadcast %cst_39 : f32 to vector<8xf32>
    %73 = vector.broadcast %71 : vector<1x32xf32> to vector<8x32xf32>
    %74 = arith.addf %14, %73 : vector<8x32xf32>
    %cst_40 = arith.constant 0.000000e+00 : f32
    %75 = vector.broadcast %cst_40 : f32 to vector<8x32xf32>
    %76 = arith.maximumf %74, %75 : vector<8x32xf32>
    %77 = arith.mulf %76, %18 : vector<8x32xf32>
    %cst_41 = arith.constant dense<0.000000e+00> : vector<8xf32>
    %78 = vector.multi_reduction <add>, %77, %cst_41 [1] : vector<8x32xf32> to vector<8xf32>
    %79 = arith.addf %72, %78 : vector<8xf32>
    %80 = vector.broadcast %15 : f32 to vector<8xf32>
    %81 = arith.addf %79, %80 : vector<8xf32>
    %82 = vector.shape_cast %81 : vector<8xf32> to vector<1x8xf32>
    %c0_42 = arith.constant 0 : index
    %83 = arith.index_cast %c3_i32 : i32 to index
    %c0_43 = arith.constant 0 : index
    %84 = vector.load %arg13[%c0_42, %83, %c0_43] : memref<1x8x8xf32, #tpu.memory_space<vmem>>, vector<1x1x8xf32>
    %85 = vector.shape_cast %84 : vector<1x1x8xf32> to vector<1x8xf32>
    %86 = vector.shape_cast %82 : vector<1x8xf32> to vector<1x1x8xf32>
    tpu.vector_store %arg13[%c0_42, %83, %c0_43], %86 {strides = array<i32>} : memref<1x8x8xf32, #tpu.memory_space<vmem>>, vector<1x1x8xf32>,
    %c4_i32 = arith.constant 4 : i32
    %87 = arith.index_cast %c4_i32 : i32 to index
    %c0_44 = arith.constant 0 : index
    %88 = vector.load %arg14[%87, %c0_44] : memref<8x32xf32, #tpu.memory_space<vmem>>, vector<1x32xf32>
    %cst_45 = arith.constant 0.000000e+00 : f32
    %89 = vector.broadcast %cst_45 : f32 to vector<8xf32>
    %90 = vector.broadcast %88 : vector<1x32xf32> to vector<8x32xf32>
    %91 = arith.addf %14, %90 : vector<8x32xf32>
    %cst_46 = arith.constant 0.000000e+00 : f32
    %92 = vector.broadcast %cst_46 : f32 to vector<8x32xf32>
    %93 = arith.maximumf %91, %92 : vector<8x32xf32>
    %94 = arith.mulf %93, %18 : vector<8x32xf32>
    %cst_47 = arith.constant dense<0.000000e+00> : vector<8xf32>
    %95 = vector.multi_reduction <add>, %94, %cst_47 [1] : vector<8x32xf32> to vector<8xf32>
    %96 = arith.addf %89, %95 : vector<8xf32>
    %97 = vector.broadcast %15 : f32 to vector<8xf32>
    %98 = arith.addf %96, %97 : vector<8xf32>
    %99 = vector.shape_cast %98 : vector<8xf32> to vector<1x8xf32>
    %c0_48 = arith.constant 0 : index
    %100 = arith.index_cast %c4_i32 : i32 to index
    %c0_49 = arith.constant 0 : index
    %101 = vector.load %arg13[%c0_48, %100, %c0_49] : memref<1x8x8xf32, #tpu.memory_space<vmem>>, vector<1x1x8xf32>
    %102 = vector.shape_cast %101 : vector<1x1x8xf32> to vector<1x8xf32>
    %103 = vector.shape_cast %99 : vector<1x8xf32> to vector<1x1x8xf32>
    tpu.vector_store %arg13[%c0_48, %100, %c0_49], %103 {strides = array<i32>} : memref<1x8x8xf32, #tpu.memory_space<vmem>>, vector<1x1x8xf32>,
    %c5_i32 = arith.constant 5 : i32
    %104 = arith.index_cast %c5_i32 : i32 to index
    %c0_50 = arith.constant 0 : index
    %105 = vector.load %arg14[%104, %c0_50] : memref<8x32xf32, #tpu.memory_space<vmem>>, vector<1x32xf32>
    %cst_51 = arith.constant 0.000000e+00 : f32
    %106 = vector.broadcast %cst_51 : f32 to vector<8xf32>
    %107 = vector.broadcast %105 : vector<1x32xf32> to vector<8x32xf32>
    %108 = arith.addf %14, %107 : vector<8x32xf32>
    %cst_52 = arith.constant 0.000000e+00 : f32
    %109 = vector.broadcast %cst_52 : f32 to vector<8x32xf32>
    %110 = arith.maximumf %108, %109 : vector<8x32xf32>
    %111 = arith.mulf %110, %18 : vector<8x32xf32>
    %cst_53 = arith.constant dense<0.000000e+00> : vector<8xf32>
    %112 = vector.multi_reduction <add>, %111, %cst_53 [1] : vector<8x32xf32> to vector<8xf32>
    %113 = arith.addf %106, %112 : vector<8xf32>
    %114 = vector.broadcast %15 : f32 to vector<8xf32>
    %115 = arith.addf %113, %114 : vector<8xf32>
    %116 = vector.shape_cast %115 : vector<8xf32> to vector<1x8xf32>
    %c0_54 = arith.constant 0 : index
    %117 = arith.index_cast %c5_i32 : i32 to index
    %c0_55 = arith.constant 0 : index
    %118 = vector.load %arg13[%c0_54, %117, %c0_55] : memref<1x8x8xf32, #tpu.memory_space<vmem>>, vector<1x1x8xf32>
    %119 = vector.shape_cast %118 : vector<1x1x8xf32> to vector<1x8xf32>
    %120 = vector.shape_cast %116 : vector<1x8xf32> to vector<1x1x8xf32>
    tpu.vector_store %arg13[%c0_54, %117, %c0_55], %120 {strides = array<i32>} : memref<1x8x8xf32, #tpu.memory_space<vmem>>, vector<1x1x8xf32>,
    %c6_i32 = arith.constant 6 : i32
    %121 = arith.index_cast %c6_i32 : i32 to index
    %c0_56 = arith.constant 0 : index
    %122 = vector.load %arg14[%121, %c0_56] : memref<8x32xf32, #tpu.memory_space<vmem>>, vector<1x32xf32>
    %cst_57 = arith.constant 0.000000e+00 : f32
    %123 = vector.broadcast %cst_57 : f32 to vector<8xf32>
    %124 = vector.broadcast %122 : vector<1x32xf32> to vector<8x32xf32>
    %125 = arith.addf %14, %124 : vector<8x32xf32>
    %cst_58 = arith.constant 0.000000e+00 : f32
    %126 = vector.broadcast %cst_58 : f32 to vector<8x32xf32>
    %127 = arith.maximumf %125, %126 : vector<8x32xf32>
    %128 = arith.mulf %127, %18 : vector<8x32xf32>
    %cst_59 = arith.constant dense<0.000000e+00> : vector<8xf32>
    %129 = vector.multi_reduction <add>, %128, %cst_59 [1] : vector<8x32xf32> to vector<8xf32>
    %130 = arith.addf %123, %129 : vector<8xf32>
    %131 = vector.broadcast %15 : f32 to vector<8xf32>
    %132 = arith.addf %130, %131 : vector<8xf32>
    %133 = vector.shape_cast %132 : vector<8xf32> to vector<1x8xf32>
    %c0_60 = arith.constant 0 : index
    %134 = arith.index_cast %c6_i32 : i32 to index
    %c0_61 = arith.constant 0 : index
    %135 = vector.load %arg13[%c0_60, %134, %c0_61] : memref<1x8x8xf32, #tpu.memory_space<vmem>>, vector<1x1x8xf32>
    %136 = vector.shape_cast %135 : vector<1x1x8xf32> to vector<1x8xf32>
    %137 = vector.shape_cast %133 : vector<1x8xf32> to vector<1x1x8xf32>
    tpu.vector_store %arg13[%c0_60, %134, %c0_61], %137 {strides = array<i32>} : memref<1x8x8xf32, #tpu.memory_space<vmem>>, vector<1x1x8xf32>,
    %c7_i32 = arith.constant 7 : i32
    %138 = arith.index_cast %c7_i32 : i32 to index
    %c0_62 = arith.constant 0 : index
    %139 = vector.load %arg14[%138, %c0_62] : memref<8x32xf32, #tpu.memory_space<vmem>>, vector<1x32xf32>
    %cst_63 = arith.constant 0.000000e+00 : f32
    %140 = vector.broadcast %cst_63 : f32 to vector<8xf32>
    %141 = vector.broadcast %139 : vector<1x32xf32> to vector<8x32xf32>
    %142 = arith.addf %14, %141 : vector<8x32xf32>
    %cst_64 = arith.constant 0.000000e+00 : f32
    %143 = vector.broadcast %cst_64 : f32 to vector<8x32xf32>
    %144 = arith.maximumf %142, %143 : vector<8x32xf32>
    %145 = arith.mulf %144, %18 : vector<8x32xf32>
    %cst_65 = arith.constant dense<0.000000e+00> : vector<8xf32>
    %146 = vector.multi_reduction <add>, %145, %cst_65 [1] : vector<8x32xf32> to vector<8xf32>
    %147 = arith.addf %140, %146 : vector<8xf32>
    %148 = vector.broadcast %15 : f32 to vector<8xf32>
    %149 = arith.addf %147, %148 : vector<8xf32>
    %150 = vector.shape_cast %149 : vector<8xf32> to vector<1x8xf32>
    %c0_66 = arith.constant 0 : index
    %151 = arith.index_cast %c7_i32 : i32 to index
    %c0_67 = arith.constant 0 : index
    %152 = vector.load %arg13[%c0_66, %151, %c0_67] : memref<1x8x8xf32, #tpu.memory_space<vmem>>, vector<1x1x8xf32>
    %153 = vector.shape_cast %152 : vector<1x1x8xf32> to vector<1x8xf32>
    %154 = vector.shape_cast %150 : vector<1x8xf32> to vector<1x1x8xf32>
    tpu.vector_store %arg13[%c0_66, %151, %c0_67], %154 {strides = array<i32>} : memref<1x8x8xf32, #tpu.memory_space<vmem>>, vector<1x1x8xf32>,
    %c8_i32 = arith.constant 8 : i32
    return
  }
  func.func @transform_0(%arg0: i32, %arg1: i32, %arg2: i32) -> (i32, i32, i32) {
    %c0_i32 = arith.constant 0 : i32
    %c0_i32_0 = arith.constant 0 : i32
    return %arg0, %arg1, %c0_i32 : i32, i32, i32
  }
  func.func @transform_1(%arg0: i32, %arg1: i32, %arg2: i32) -> (i32, i32, i32) {
    %c0_i32 = arith.constant 0 : i32
    %c0_i32_0 = arith.constant 0 : i32
    return %arg0, %arg2, %c0_i32 : i32, i32, i32
  }
  func.func @transform_2(%arg0: i32, %arg1: i32, %arg2: i32) -> (i32, i32) {
    %c0_i32 = arith.constant 0 : i32
    %c0_i32_0 = arith.constant 0 : i32
    %c0_i32_1 = arith.constant 0 : i32
    return %c0_i32, %c0_i32_0 : i32, i32
  }
  func.func @transform_3(%arg0: i32, %arg1: i32, %arg2: i32) -> (i32, i32) {
    %c0_i32 = arith.constant 0 : i32
    %c0_i32_0 = arith.constant 0 : i32
    %c0_i32_1 = arith.constant 0 : i32
    return %c0_i32, %c0_i32_0 : i32, i32
  }
  func.func @transform_4(%arg0: i32, %arg1: i32, %arg2: i32) -> (i32, i32) {
    %c0_i32 = arith.constant 0 : i32
    %c0_i32_0 = arith.constant 0 : i32
    %c0_i32_1 = arith.constant 0 : i32
    return %c0_i32, %c0_i32_0 : i32, i32
  }
  func.func @transform_5(%arg0: i32, %arg1: i32, %arg2: i32) -> (i32, i32) {
    %c0_i32 = arith.constant 0 : i32
    %c0_i32_0 = arith.constant 0 : i32
    %c0_i32_1 = arith.constant 0 : i32
    return %c0_i32, %c0_i32_0 : i32, i32
  }
  func.func @transform_6(%arg0: i32, %arg1: i32, %arg2: i32) -> (i32, i32) {
    %c0_i32 = arith.constant 0 : i32
    %c0_i32_0 = arith.constant 0 : i32
    %c0_i32_1 = arith.constant 0 : i32
    return %c0_i32, %c0_i32_0 : i32, i32
  }
  func.func @transform_7(%arg0: i32, %arg1: i32, %arg2: i32) -> (i32, i32) {
    %c0_i32 = arith.constant 0 : i32
    %c0_i32_0 = arith.constant 0 : i32
    %c0_i32_1 = arith.constant 0 : i32
    return %c0_i32, %c0_i32_0 : i32, i32
  }
  func.func @transform_8(%arg0: i32, %arg1: i32, %arg2: i32) -> (i32, i32) {
    %c0_i32 = arith.constant 0 : i32
    %c0_i32_0 = arith.constant 0 : i32
    %c0_i32_1 = arith.constant 0 : i32
    return %c0_i32, %c0_i32_0 : i32, i32
  }
  func.func @transform_9(%arg0: i32, %arg1: i32, %arg2: i32) -> (i32, i32, i32) {
    %c0_i32 = arith.constant 0 : i32
    %c0_i32_0 = arith.constant 0 : i32
    return %arg0, %arg1, %c0_i32 : i32, i32, i32
  }
  func.func @transform_10(%arg0: i32, %arg1: i32, %arg2: i32) -> (i32, i32, i32) {
    %c0_i32 = arith.constant 0 : i32
    return %arg0, %arg1, %arg2 : i32, i32, i32
  }
}

</mosaic_0001>

<llo_original>
// kernel: tpu_custom_call.1
$region0: #{tpu_custom_call.1}
  #allocation0 [shape = 'u32[]', space=smem, size = 0x4, offset = 0x4, fixed_abs, tag = 'smem constant byte address 0x4 - core index']
  #allocation1 [shape = 'u32[144,128]{1,0:T(1,128)}', space=vmem, size = 0x12000, scoped, tag = 'internal scratch']
  #allocation2 [shape = 'f32[8,32]{1,0:T(8,128)}', space=vmem, size = 0x1000, scoped, tag = 'scratch operand']
  #allocation3 [shape = 'f32[1,1]{1,0:T(1,128)S(6)}', space=smem, size = 0x200, scoped, tag = 'scoped memory for tpu_custom_call.1']
  %s0 = inlined_call_operand.hbm [shape: f32[2,8,32], index: 0, kind: input, shape index: {}]
  %s1 = inlined_call_operand.hbm [shape: f32[2,8,32], index: 1, kind: input, shape index: {}]
  %s2 = inlined_call_operand.hbm [shape: f32[32,128], index: 2, kind: input, shape index: {}]
  %s3 = inlined_call_operand.vmem [shape: f32[1,128], index: 3, kind: input, shape index: {}]
  %s4 = inlined_call_operand.hbm [shape: f32[32,32], index: 4, kind: input, shape index: {}]
  %s5 = inlined_call_operand.hbm [shape: f32[32,32], index: 5, kind: input, shape index: {}]
  %s6 = inlined_call_operand.vmem [shape: f32[1,32], index: 6, kind: input, shape index: {}]
  %s7 = inlined_call_operand.vmem [shape: f32[1,32], index: 7, kind: input, shape index: {}]
  %s8 = inlined_call_operand.<no memory space> [shape: f32[1,1], index: 8, kind: input, shape index: {}]
  %s9 = inlined_call_operand.hbm [shape: f32[2,8,128], index: 9, kind: output, shape index: {0}]
  %s10 = inlined_call_operand.hbm [shape: f32[2,8,8], index: 10, kind: output, shape index: {1}]
  %11 = xla_tuple %s9, %s10
  %s12 = sld [smem:[#allocation0]]
  $region101: #{tpu_custom_call.1} parent=0
    _
  %s14 = ssub.s32 1, %s12
  %s15 = scalar_select 0, %s14, %s12
  %16 = sst [smem:[#allocation3]] %s8
  $region1: #{tpu_custom_call.1} parent=0
    #allocation4 [shape = 'u8[8192]{0}', space=vmem, size = 0x2000, scoped, tag = 'input window, operand 0']
    #allocation5 [shape = 's32[2]{0}', space=sflag, size = 0x8, scoped, tag = 'scoped memory for tpu_custom_call.1']
    #allocation6 [shape = 's32[2]{0}', space=sflag, size = 0x8, scoped, tag = 'scoped memory for tpu_custom_call.1']
    #allocation7 [shape = 'u8[8192]{0}', space=vmem, size = 0x2000, scoped, tag = 'input window, operand 1']
    #allocation8 [shape = 's32[2]{0}', space=sflag, size = 0x8, scoped, tag = 'scoped memory for tpu_custom_call.1']
    #allocation9 [shape = 'u8[16384]{0}', space=vmem, size = 0x4000, scoped, tag = 'input window, operand 2, single buffered']
    #allocation10 [shape = 'u8[16384]{0}', space=vmem, size = 0x4000, scoped, tag = 'input window, operand 4, single buffered']
    #allocation11 [shape = 's32[1]{0}', space=sflag, size = 0x4, scoped, tag = 'scoped memory for tpu_custom_call.1']
    #allocation12 [shape = 'u8[16384]{0}', space=vmem, size = 0x4000, scoped, tag = 'input window, operand 5, single buffered']
    #allocation13 [shape = 'u8[8192]{0}', space=vmem, size = 0x2000, scoped, tag = 'output window, operand 0']
    #allocation14 [shape = 'u8[8192]{0}', space=vmem, size = 0x2000, scoped, tag = 'output window, operand 1']
    #allocation15 [shape = 's32[2]{0}', space=sflag, size = 0x8, scoped, tag = 'scoped memory for tpu_custom_call.1']
    %17 = vsyncpa [#allocation5], 0
    %s18 = scalar_lea.sflag [#allocation5], 1
    %19 = vsyncpa %s18, 0
    %20 = vsyncpa [#allocation8], 0
    %s21 = scalar_lea.sflag [#allocation8], 1
    %22 = vsyncpa %s21, 0
    %23 = vsyncpa [#allocation11], 0
    %24 = vsyncpa [#allocation6], 0
    %s25 = scalar_lea.sflag [#allocation6], 1
    %26 = vsyncpa %s25, 0
    %27 = vsyncpa [#allocation15], 0
    %s28 = scalar_lea.sflag [#allocation15], 1
    %29 = vsyncpa %s28, 0
    loop: start=0, step=1, limit=4
    $region2: #{tpu_custom_call.1} parent=1 // loop_pre_header
      _
    $region3: #{tpu_custom_call.1} parent=1 // loop_header
      %s31 = sphi 0, %s35
      %p32 = scmp.ge.s32.totalorder %s31, 4
      %s38 = sphi 0, %s57
      %s39 = sphi 0, %s53
      %s40 = sphi 0, %s49
      %s41 = sphi 0, %s38
      %s42 = sphi 0, %s39
      %s43 = sphi 0, %s40
      %s44 = sphi 0, %s41
      %s45 = sphi 0, %s42
      %s46 = sphi 0, %s43
      %s62 = sphi 0, %s64
      %s65 = sphi 0, %s62
      %s66 = sphi 0, %s65
      %s82 = sphi 0, %s66
      %s90 = sphi 0, %s92
      %s93 = sphi 0, %s90
      %s94 = sphi 0, %s93
      %s110 = sphi 0, %s94
      %s114 = sphi 0, %s114
      %s116 = sphi 0, %s114
      %s117 = sphi 0, %s116
      %s131 = sphi 0, %s117
      %s135 = sphi 0, %s135
      %s137 = sphi 0, %s135
      %s138 = sphi 0, %s137
      %s152 = sphi 0, %s138
      %s156 = sphi 0, %s156
      %s158 = sphi 0, %s156
      %s159 = sphi 0, %s158
      %s173 = sphi 0, %s159
      %s177 = sphi 0, %s177
      %s179 = sphi 0, %s177
      %s180 = sphi 0, %s179
      %s194 = sphi 0, %s180
      %s198 = sphi 0, %s198
      %s200 = sphi 0, %s198
      %s201 = sphi 0, %s200
      %s215 = sphi 0, %s201
      %s219 = sphi 0, %s219
      %s221 = sphi 0, %s219
      %s222 = sphi 0, %s221
      %s236 = sphi 0, %s222
      %s240 = sphi 0, %s240
      %s242 = sphi 0, %s240
      %s243 = sphi 0, %s242
      %s257 = sphi 0, %s243
      %s265 = sphi 0, %s267
      %s268 = sphi 0, %s265
      %s269 = sphi 0, %s268
      %s285 = sphi 0, %s269
      %s295 = sphi 0, %s297
      %s298 = sphi 0, %s295
      %s299 = sphi 0, %s298
      %s315 = sphi 0, %s299
    $region4: #{tpu_custom_call.1} parent=1 // loop_header_branch
      %34 = sbr.rel (%p32) target = $region8
    $region5: #{tpu_custom_call.1} parent=1 // loop_body
      %s36 = ssub.s32 %s31, 1
      %s37 = ssub.s32 %s31, 2
      %s47 = sadd.s32 1, %s40
      %p48 = scmp.ge.s32.totalorder %s47, 1
      %s49 = scalar_select %p48, 0, %s47
      %s50 = sadd.s32 1, %s39
      %s51 = scalar_select %p48, %s50, %s39
      %p52 = scmp.ge.s32.totalorder %s51, 1
      %s53 = scalar_select %p52, 0, %s51
      %s54 = sadd.s32 1, %s38
      %s55 = scalar_select %p52, %s54, %s38
      %p56 = scmp.ge.s32.totalorder %s55, 2
      %s57 = scalar_select %p56, 0, %s55
      %s58 = ssub.s32 %s38, %s57
      %s59 = ssub.s32 %s39, %s53
      %s60 = sor.u32 %s58, %s59
      %p61 = scmp.eq.s32.totalorder %s60, 0
      %s63 = sadd.s32 %s62, 1
      %s64 = scalar_select %p61, %s62, %s63
      %p67 = pneg %p61
      %p68 = scmp.eq.s32.totalorder %s31, 1
      %p69 = por %p67, %p68
      %p70 = scmp.ne.s32.totalorder %s62, %s65
      %p71 = scmp.eq.s32.totalorder %s31, 0
      %p72 = por %p70, %p71
      %p73 = scmp.ne.s32.totalorder %s62, %s65
      %p74 = scmp.eq.s32.totalorder %s36, 1
      %p75 = por %p73, %p74
      %p76 = scmp.ne.s32.totalorder %s65, %s66
      %p77 = scmp.eq.s32.totalorder %s36, 0
      %p78 = por %p76, %p77
      %p79 = scmp.ne.s32.totalorder %s65, %s66
      %p80 = scmp.eq.s32.totalorder %s37, 1
      %p81 = por %p79, %p80
      %p83 = scmp.ne.s32.totalorder %s66, %s82
      %p84 = scmp.eq.s32.totalorder %s37, 0
      %p85 = por %p83, %p84
      %s86 = ssub.s32 %s38, %s57
      %s87 = ssub.s32 %s40, %s49
      %s88 = sor.u32 %s86, %s87
      %p89 = scmp.eq.s32.totalorder %s88, 0
      %s91 = sadd.s32 %s90, 1
      %s92 = scalar_select %p89, %s90, %s91
      %p95 = pneg %p89
      %p96 = scmp.eq.s32.totalorder %s31, 1
      %p97 = por %p95, %p96
      %p98 = scmp.ne.s32.totalorder %s90, %s93
      %p99 = scmp.eq.s32.totalorder %s31, 0
      %p100 = por %p98, %p99
      %p101 = scmp.ne.s32.totalorder %s90, %s93
      %p102 = scmp.eq.s32.totalorder %s36, 1
      %p103 = por %p101, %p102
      %p104 = scmp.ne.s32.totalorder %s93, %s94
      %p105 = scmp.eq.s32.totalorder %s36, 0
      %p106 = por %p104, %p105
      %p107 = scmp.ne.s32.totalorder %s93, %s94
      %p108 = scmp.eq.s32.totalorder %s37, 1
      %p109 = por %p107, %p108
      %p111 = scmp.ne.s32.totalorder %s94, %s110
      %p112 = scmp.eq.s32.totalorder %s37, 0
      %p113 = por %p111, %p112
      %s115 = sadd.s32 %s114, 1
      %p118 = scmp.eq.s32.totalorder %s31, 1
      %p119 = scmp.ne.s32.totalorder %s114, %s116
      %p120 = scmp.eq.s32.totalorder %s31, 0
      %p121 = por %p119, %p120
      %p122 = scmp.ne.s32.totalorder %s114, %s116
      %p123 = scmp.eq.s32.totalorder %s36, 1
      %p124 = por %p122, %p123
      %p125 = scmp.ne.s32.totalorder %s116, %s117
      %p126 = scmp.eq.s32.totalorder %s36, 0
      %p127 = por %p125, %p126
      %p128 = scmp.ne.s32.totalorder %s116, %s117
      %p129 = scmp.eq.s32.totalorder %s37, 1
      %p130 = por %p128, %p129
      %p132 = scmp.ne.s32.totalorder %s117, %s131
      %p133 = scmp.eq.s32.totalorder %s37, 0
      %p134 = por %p132, %p133
      %s136 = sadd.s32 %s135, 1
      %p139 = scmp.eq.s32.totalorder %s31, 1
      %p140 = scmp.ne.s32.totalorder %s135, %s137
      %p141 = scmp.eq.s32.totalorder %s31, 0
      %p142 = por %p140, %p141
      %p143 = scmp.ne.s32.totalorder %s135, %s137
      %p144 = scmp.eq.s32.totalorder %s36, 1
      %p145 = por %p143, %p144
      %p146 = scmp.ne.s32.totalorder %s137, %s138
      %p147 = scmp.eq.s32.totalorder %s36, 0
      %p148 = por %p146, %p147
      %p149 = scmp.ne.s32.totalorder %s137, %s138
      %p150 = scmp.eq.s32.totalorder %s37, 1
      %p151 = por %p149, %p150
      %p153 = scmp.ne.s32.totalorder %s138, %s152
      %p154 = scmp.eq.s32.totalorder %s37, 0
      %p155 = por %p153, %p154
      %s157 = sadd.s32 %s156, 1
      %p160 = scmp.eq.s32.totalorder %s31, 1
      %p161 = scmp.ne.s32.totalorder %s156, %s158
      %p162 = scmp.eq.s32.totalorder %s31, 0
      %p163 = por %p161, %p162
      %p164 = scmp.ne.s32.totalorder %s156, %s158
      %p165 = scmp.eq.s32.totalorder %s36, 1
      %p166 = por %p164, %p165
      %p167 = scmp.ne.s32.totalorder %s158, %s159
      %p168 = scmp.eq.s32.totalorder %s36, 0
      %p169 = por %p167, %p168
      %p170 = scmp.ne.s32.totalorder %s158, %s159
      %p171 = scmp.eq.s32.totalorder %s37, 1
      %p172 = por %p170, %p171
      %p174 = scmp.ne.s32.totalorder %s159, %s173
      %p175 = scmp.eq.s32.totalorder %s37, 0
      %p176 = por %p174, %p175
      %s178 = sadd.s32 %s177, 1
      %p181 = scmp.eq.s32.totalorder %s31, 1
      %p182 = scmp.ne.s32.totalorder %s177, %s179
      %p183 = scmp.eq.s32.totalorder %s31, 0
      %p184 = por %p182, %p183
      %p185 = scmp.ne.s32.totalorder %s177, %s179
      %p186 = scmp.eq.s32.totalorder %s36, 1
      %p187 = por %p185, %p186
      %p188 = scmp.ne.s32.totalorder %s179, %s180
      %p189 = scmp.eq.s32.totalorder %s36, 0
      %p190 = por %p188, %p189
      %p191 = scmp.ne.s32.totalorder %s179, %s180
      %p192 = scmp.eq.s32.totalorder %s37, 1
      %p193 = por %p191, %p192
      %p195 = scmp.ne.s32.totalorder %s180, %s194
      %p196 = scmp.eq.s32.totalorder %s37, 0
      %p197 = por %p195, %p196
      %s199 = sadd.s32 %s198, 1
      %p202 = scmp.eq.s32.totalorder %s31, 1
      %p203 = scmp.ne.s32.totalorder %s198, %s200
      %p204 = scmp.eq.s32.totalorder %s31, 0
      %p205 = por %p203, %p204
      %p206 = scmp.ne.s32.totalorder %s198, %s200
      %p207 = scmp.eq.s32.totalorder %s36, 1
      %p208 = por %p206, %p207
      %p209 = scmp.ne.s32.totalorder %s200, %s201
      %p210 = scmp.eq.s32.totalorder %s36, 0
      %p211 = por %p209, %p210
      %p212 = scmp.ne.s32.totalorder %s200, %s201
      %p213 = scmp.eq.s32.totalorder %s37, 1
      %p214 = por %p212, %p213
      %p216 = scmp.ne.s32.totalorder %s201, %s215
      %p217 = scmp.eq.s32.totalorder %s37, 0
      %p218 = por %p216, %p217
      %s220 = sadd.s32 %s219, 1
      %p223 = scmp.eq.s32.totalorder %s31, 1
      %p224 = scmp.ne.s32.totalorder %s219, %s221
      %p225 = scmp.eq.s32.totalorder %s31, 0
      %p226 = por %p224, %p225
      %p227 = scmp.ne.s32.totalorder %s219, %s221
      %p228 = scmp.eq.s32.totalorder %s36, 1
      %p229 = por %p227, %p228
      %p230 = scmp.ne.s32.totalorder %s221, %s222
      %p231 = scmp.eq.s32.totalorder %s36, 0
      %p232 = por %p230, %p231
      %p233 = scmp.ne.s32.totalorder %s221, %s222
      %p234 = scmp.eq.s32.totalorder %s37, 1
      %p235 = por %p233, %p234
      %p237 = scmp.ne.s32.totalorder %s222, %s236
      %p238 = scmp.eq.s32.totalorder %s37, 0
      %p239 = por %p237, %p238
      %s241 = sadd.s32 %s240, 1
      %p244 = scmp.eq.s32.totalorder %s31, 1
      %p245 = scmp.ne.s32.totalorder %s240, %s242
      %p246 = scmp.eq.s32.totalorder %s31, 0
      %p247 = por %p245, %p246
      %p248 = scmp.ne.s32.totalorder %s240, %s242
      %p249 = scmp.eq.s32.totalorder %s36, 1
      %p250 = por %p248, %p249
      %p251 = scmp.ne.s32.totalorder %s242, %s243
      %p252 = scmp.eq.s32.totalorder %s36, 0
      %p253 = por %p251, %p252
      %p254 = scmp.ne.s32.totalorder %s242, %s243
      %p255 = scmp.eq.s32.totalorder %s37, 1
      %p256 = por %p254, %p255
      %p258 = scmp.ne.s32.totalorder %s243, %s257
      %p259 = scmp.eq.s32.totalorder %s37, 0
      %p260 = por %p258, %p259
      %s261 = ssub.s32 %s38, %s57
      %s262 = ssub.s32 %s39, %s53
      %s263 = sor.u32 %s261, %s262
      %p264 = scmp.eq.s32.totalorder %s263, 0
      %s266 = sadd.s32 %s265, 1
      %s267 = scalar_select %p264, %s265, %s266
      %p270 = pneg %p264
      %p271 = scmp.eq.s32.totalorder %s31, 1
      %p272 = por %p270, %p271
      %p273 = scmp.ne.s32.totalorder %s265, %s268
      %p274 = scmp.eq.s32.totalorder %s31, 0
      %p275 = por %p273, %p274
      %p276 = scmp.ne.s32.totalorder %s265, %s268
      %p277 = scmp.eq.s32.totalorder %s36, 1
      %p278 = por %p276, %p277
      %p279 = scmp.ne.s32.totalorder %s268, %s269
      %p280 = scmp.eq.s32.totalorder %s36, 0
      %p281 = por %p279, %p280
      %p282 = scmp.ne.s32.totalorder %s268, %s269
      %p283 = scmp.eq.s32.totalorder %s37, 1
      %p284 = por %p282, %p283
      %p286 = scmp.ne.s32.totalorder %s269, %s285
      %p287 = scmp.eq.s32.totalorder %s37, 0
      %p288 = por %p286, %p287
      %s289 = ssub.s32 %s38, %s57
      %s290 = ssub.s32 %s39, %s53
      %s291 = sor.u32 %s289, %s290
      %s292 = ssub.s32 %s40, %s49
      %s293 = sor.u32 %s291, %s292
      %p294 = scmp.eq.s32.totalorder %s293, 0
      %s296 = sadd.s32 %s295, 1
      %s297 = scalar_select %p294, %s295, %s296
      %p300 = pneg %p294
      %p301 = scmp.eq.s32.totalorder %s31, 1
      %p302 = por %p300, %p301
      %p303 = scmp.ne.s32.totalorder %s295, %s298
      %p304 = scmp.eq.s32.totalorder %s31, 0
      %p305 = por %p303, %p304
      %p306 = scmp.ne.s32.totalorder %s295, %s298
      %p307 = scmp.eq.s32.totalorder %s36, 1
      %p308 = por %p306, %p307
      %p309 = scmp.ne.s32.totalorder %s298, %s299
      %p310 = scmp.eq.s32.totalorder %s36, 0
      %p311 = por %p309, %p310
      %p312 = scmp.ne.s32.totalorder %s298, %s299
      %p313 = scmp.eq.s32.totalorder %s37, 1
      %p314 = por %p312, %p313
      %p316 = scmp.ne.s32.totalorder %s299, %s315
      %p317 = scmp.eq.s32.totalorder %s37, 0
      %p318 = por %p316, %p317
      %p319 = scmp.le.s32.totalorder 1, %s31
      %p320 = scmp.lt.s32.totalorder %s31, 3
      %p321 = pnand %p319, %p320
      %p322 = pneg %p321
      // Predicated region
      $region9: #{tpu_custom_call.1} parent=5 // pred_check
        _
      $region10: #{tpu_custom_call.1} parent=5 // pred_check_branch
        %324 = sbr.rel (%p321) target = $region12
      $region11: #{tpu_custom_call.1} parent=5 // pred_region
        %s325 = ssub.s32 %s31, 1
        // Predicated region
        $region13: #{tpu_custom_call.1} parent=11 // pred_check
          %p326 = pneg %p127
        $region14: #{tpu_custom_call.1} parent=11 // pred_check_branch
          %328 = sbr.rel (%p326) target = $region16
        $region15: #{tpu_custom_call.1} parent=11 // pred_region
          %s330 = ssub.s32 512, 512
          %331 = vsyncadd [#allocation8], %s330
          %s332 = sshll.u32 [#allocation9], 4
          %s333 = int_to_ptr.vmem [resolvable:$true] %s332
          %338 = dma.hbm_to_vmem [thread:$0]  %s2, 512, %s333, [#allocation8], 128, 128, 8
        $region16: #{tpu_custom_call.1} parent=11 // pred_fallthru
          _
        // Predicated region
        $region17: #{tpu_custom_call.1} parent=11 // pred_check
          %p339 = pneg %p148
        $region18: #{tpu_custom_call.1} parent=11 // pred_check_branch
          %341 = sbr.rel (%p339) target = $region20
        $region19: #{tpu_custom_call.1} parent=11 // pred_region
          _
        $region20: #{tpu_custom_call.1} parent=11 // pred_fallthru
          _
        // Predicated region
        $region21: #{tpu_custom_call.1} parent=11 // pred_check
          %p342 = pneg %p169
        $region22: #{tpu_custom_call.1} parent=11 // pred_check_branch
          %344 = sbr.rel (%p342) target = $region24
        $region23: #{tpu_custom_call.1} parent=11 // pred_region
          %s346 = ssub.s32 512, 512
          %347 = vsyncadd [#allocation11], %s346
          %s348 = sshll.u32 [#allocation10], 4
          %s349 = int_to_ptr.vmem [resolvable:$true] %s348
          %354 = dma.hbm_to_vmem [thread:$0]  %s4, 512, %s349, [#allocation11], 128, 128, 8
        $region24: #{tpu_custom_call.1} parent=11 // pred_fallthru
          _
        // Predicated region
        $region25: #{tpu_custom_call.1} parent=11 // pred_check
          %p355 = pneg %p190
        $region26: #{tpu_custom_call.1} parent=11 // pred_check_branch
          %357 = sbr.rel (%p355) target = $region28
        $region27: #{tpu_custom_call.1} parent=11 // pred_region
          %s359 = ssub.s32 512, 512
          %360 = vsyncadd [#allocation11], %s359
          %s361 = sshll.u32 [#allocation12], 4
          %s362 = int_to_ptr.vmem [resolvable:$true] %s361
          %367 = dma.hbm_to_vmem [thread:$0]  %s5, 512, %s362, [#allocation11], 128, 128, 8
        $region28: #{tpu_custom_call.1} parent=11 // pred_fallthru
          _
        // Predicated region
        $region29: #{tpu_custom_call.1} parent=11 // pred_check
          %p368 = pneg %p211
        $region30: #{tpu_custom_call.1} parent=11 // pred_check_branch
          %370 = sbr.rel (%p368) target = $region32
        $region31: #{tpu_custom_call.1} parent=11 // pred_region
          _
        $region32: #{tpu_custom_call.1} parent=11 // pred_fallthru
          _
        // Predicated region
        $region33: #{tpu_custom_call.1} parent=11 // pred_check
          %p371 = pneg %p232
        $region34: #{tpu_custom_call.1} parent=11 // pred_check_branch
          %373 = sbr.rel (%p371) target = $region36
        $region35: #{tpu_custom_call.1} parent=11 // pred_region
          _
        $region36: #{tpu_custom_call.1} parent=11 // pred_fallthru
          _
        // Predicated region
        $region37: #{tpu_custom_call.1} parent=11 // pred_check
          %p374 = pneg %p253
        $region38: #{tpu_custom_call.1} parent=11 // pred_check_branch
          %376 = sbr.rel (%p374) target = $region40
        $region39: #{tpu_custom_call.1} parent=11 // pred_region
          _
        $region40: #{tpu_custom_call.1} parent=11 // pred_fallthru
          _
      $region12: #{tpu_custom_call.1} parent=5 // pred_fallthru
        _
      %p377 = scmp.lt.s32.totalorder %s31, 2
      // Predicated region
      $region41: #{tpu_custom_call.1} parent=5 // pred_check
        %p378 = pneg %p377
      $region42: #{tpu_custom_call.1} parent=5 // pred_check_branch
        %380 = sbr.rel (%p378) target = $region44
      $region43: #{tpu_custom_call.1} parent=5 // pred_region
        // Predicated region
        $region45: #{tpu_custom_call.1} parent=43 // pred_check
          %p381 = pneg %p72
        $region46: #{tpu_custom_call.1} parent=43 // pred_check_branch
          %383 = sbr.rel (%p381) target = $region48
        $region47: #{tpu_custom_call.1} parent=43 // pred_region
          %s384 = sand.u32 %s62, 1
          %s385 = scalar_lea.sflag [#allocation5], %s384
          %s386 = sand.u32 %s62, 1
          %s387 = smul.addr %s386, 8
          %s388 = scalar_lea.vmem [#allocation4], %s387
          %s390 = ssub.s32 128, 128
          %391 = vsyncadd %s385, %s390
          %s392 = sadd.s32 %s39, %s38
          %s393 = smul.addr %s392, 128
          %s394 = scalar_lea.hbm %s0, %s393
          %s396 = sshll.u32 %s388, 4
          %s397 = int_to_ptr.vmem [resolvable:$true] %s396
          %399 = dma.hbm_to_vmem [thread:$0]  %s394, 128, %s397, %s385
        $region48: #{tpu_custom_call.1} parent=43 // pred_fallthru
          _
        // Predicated region
        $region49: #{tpu_custom_call.1} parent=43 // pred_check
          %p400 = pneg %p100
        $region50: #{tpu_custom_call.1} parent=43 // pred_check_branch
          %402 = sbr.rel (%p400) target = $region52
        $region51: #{tpu_custom_call.1} parent=43 // pred_region
          %s403 = sand.u32 %s31, 1
          %s404 = scalar_lea.sflag [#allocation8], %s403
          %s405 = sand.u32 %s90, 1
          %s406 = smul.addr %s405, 8
          %s407 = scalar_lea.vmem [#allocation7], %s406
          %s409 = ssub.s32 128, 128
          %410 = vsyncadd %s404, %s409
          %s411 = sadd.s32 %s40, %s38
          %s412 = smul.addr %s411, 128
          %s413 = scalar_lea.hbm %s1, %s412
          %s415 = sshll.u32 %s407, 4
          %s416 = int_to_ptr.vmem [resolvable:$true] %s415
          %418 = dma.hbm_to_vmem [thread:$0]  %s413, 128, %s416, %s404
        $region52: #{tpu_custom_call.1} parent=43 // pred_fallthru
          _
      $region44: #{tpu_custom_call.1} parent=5 // pred_fallthru
        _
      %p419 = scmp.le.s32.totalorder 1, %s31
      %p420 = scmp.lt.s32.totalorder %s31, 3
      %p421 = pnand %p419, %p420
      %p422 = pneg %p421
      // Predicated region
      $region53: #{tpu_custom_call.1} parent=5 // pred_check
        _
      $region54: #{tpu_custom_call.1} parent=5 // pred_check_branch
        %424 = sbr.rel (%p421) target = $region56
      $region55: #{tpu_custom_call.1} parent=5 // pred_region
        %s425 = ssub.s32 %s31, 1
        %s426 = sand.u32 %s65, 1
        %s427 = scalar_lea.sflag [#allocation5], %s426
        %s428 = sand.u32 %s65, 1
        %s429 = smul.addr %s428, 8
        %s430 = scalar_lea.vmem [#allocation4], %s429
        // Predicated region
        $region57: #{tpu_custom_call.1} parent=55 // pred_check
          %p431 = pneg %p78
        $region58: #{tpu_custom_call.1} parent=55 // pred_check_branch
          %433 = sbr.rel (%p431) target = $region60
        $region59: #{tpu_custom_call.1} parent=55 // pred_region
          %434 = dma.done %s427, 128
        $region60: #{tpu_custom_call.1} parent=55 // pred_fallthru
          _
        %s435 = sand.u32 %s36, 1
        %s436 = scalar_lea.sflag [#allocation8], %s435
        %s437 = sand.u32 %s93, 1
        %s438 = smul.addr %s437, 8
        %s439 = scalar_lea.vmem [#allocation7], %s438
        // Predicated region
        $region61: #{tpu_custom_call.1} parent=55 // pred_check
          %p440 = pneg %p106
        $region62: #{tpu_custom_call.1} parent=55 // pred_check_branch
          %442 = sbr.rel (%p440) target = $region64
        $region63: #{tpu_custom_call.1} parent=55 // pred_region
          %443 = dma.done %s436, 128
        $region64: #{tpu_custom_call.1} parent=55 // pred_fallthru
          _
        // Predicated region
        $region65: #{tpu_custom_call.1} parent=55 // pred_check
          %p444 = pneg %p127
        $region66: #{tpu_custom_call.1} parent=55 // pred_check_branch
          %446 = sbr.rel (%p444) target = $region68
        $region67: #{tpu_custom_call.1} parent=55 // pred_region
          %447 = dma.done [#allocation8], 512
        $region68: #{tpu_custom_call.1} parent=55 // pred_fallthru
          _
        // Predicated region
        $region69: #{tpu_custom_call.1} parent=55 // pred_check
          %p448 = pneg %p169
        $region70: #{tpu_custom_call.1} parent=55 // pred_check_branch
          %450 = sbr.rel (%p448) target = $region72
        $region71: #{tpu_custom_call.1} parent=55 // pred_region
          %451 = dma.done [#allocation11], 512
        $region72: #{tpu_custom_call.1} parent=55 // pred_fallthru
          _
        // Predicated region
        $region73: #{tpu_custom_call.1} parent=55 // pred_check
          %p452 = pneg %p190
        $region74: #{tpu_custom_call.1} parent=55 // pred_check_branch
          %454 = sbr.rel (%p452) target = $region76
        $region75: #{tpu_custom_call.1} parent=55 // pred_region
          %455 = dma.done [#allocation11], 512
        $region76: #{tpu_custom_call.1} parent=55 // pred_fallthru
          _
        %s456 = sand.u32 %s65, 1
        %s457 = scalar_lea.sflag [#allocation5], %s456
        %s458 = sand.u32 %s65, 1
        %s459 = smul.addr %s458, 8
        %s460 = scalar_lea.vmem [#allocation4], %s459
        %p461 = pneg %p78
        %p462 = pneg %p75
        %s463 = sand.u32 %s36, 1
        %s464 = scalar_lea.sflag [#allocation8], %s463
        %s465 = sand.u32 %s93, 1
        %s466 = smul.addr %s465, 8
        %s467 = scalar_lea.vmem [#allocation7], %s466
        %p468 = pneg %p106
        %p469 = pneg %p103
        %p470 = pneg %p127
        %p471 = pneg %p124
        %p472 = pneg %p148
        %p473 = pneg %p145
        %p474 = pneg %p169
        %p475 = pneg %p166
        %p476 = pneg %p190
        %p477 = pneg %p187
        %p478 = pneg %p211
        %p479 = pneg %p208
        %p480 = pneg %p232
        %p481 = pneg %p229
        %p482 = pneg %p253
        %p483 = pneg %p250
        %p484 = pneg %p281
        %p485 = pneg %p278
        %s486 = sand.u32 %s268, 1
        %s487 = scalar_lea.sflag [#allocation6], %s486
        %s488 = sand.u32 %s268, 1
        %s489 = smul.addr %s488, 8
        %s490 = scalar_lea.vmem [#allocation13], %s489
        %p491 = pneg %p311
        %p492 = pneg %p308
        %s493 = sand.u32 %s298, 1
        %s494 = scalar_lea.sflag [#allocation15], %s493
        %s495 = sand.u32 %s298, 1
        %s496 = smul.addr %s495, 8
        %s497 = scalar_lea.vmem [#allocation14], %s496
        %p498 = scmp.eq.s32.totalorder %s43, 0
        // Predicated region
        $region77: #{tpu_custom_call.1} parent=55 // pred_check
          %p499 = pneg %p498
        $region78: #{tpu_custom_call.1} parent=55 // pred_check_branch
          %501 = sbr.rel (%p499) target = $region80
        $region79: #{tpu_custom_call.1} parent=55 // pred_region
          %v502 = vld [vmem:[%s430] sm:$0xff]
          %v503 = vld [vmem:[#allocation9] sm:$0xff]
          %v504 = vld [vmem:[#allocation9 + $0x8] sm:$0xff]
          %v505 = vld [vmem:[#allocation9 + $0x10] sm:$0xff]
          %v506 = vld [vmem:[#allocation9 + $0x18] sm:$0xff]
          %v507 = vld [vmem:[%s3] sm:$0x1]
          %v509 = vlaneseq
          %v510 = vshrl.u32 %v509, 7
          %v511 = vsub.s32 0, %v510
          %v512 = vrot.slane %v507, %v511
          %vm514 = vcmask 261120
          %v516 = vsel %vm514, %v502, 0
          %518 = vmatprep.subr.mxu0 0.0
          %519 = vmatpush1.msra.mxu0 0.0
          %520 = vmatprep.subr.mxu0 0.0
          %521 = vmatpush1.msra.mxu0 0.0
          %522 = vmatprep.subr.mxu0 0.0
          %523 = vmatpush1.msra.mxu0 0.0
          %524 = vmatprep.subr.mxu0 0.0
          %525 = vmatpush1.msra.mxu0 0.0
          %526 = vmatprep.subr.mxu0 0.0
          %527 = vmatpush1.msra.mxu0 0.0
          %528 = vmatprep.subr.mxu0 0.0
          %529 = vmatpush1.msra.mxu0 0.0
          %530 = vmatprep.subr.mxu0 0.0
          %531 = vmatpush1.msra.mxu0 0.0
          %532 = vmatprep.subr.mxu0 0.0
          %533 = vmatpush1.msra.mxu0 0.0
          %534 = vmatprep.subr.mxu0 0.0
          %535 = vmatpush1.msra.mxu0 0.0
          %536 = vmatprep.subr.mxu0 0.0
          %537 = vmatpush1.msra.mxu0 0.0
          %538 = vmatprep.subr.mxu0 0.0
          %539 = vmatpush1.msra.mxu0 0.0
          %540 = vmatprep.subr.mxu0 0.0
          %541 = vmatpush1.msra.mxu0 0.0
          %542 = vmatprep.subr.mxu0 0.0
          %543 = vmatpush1.msra.mxu0 %v506
          %544 = vmatprep.subr.mxu0 0.0
          %545 = vmatpush1.msra.mxu0 %v505
          %546 = vmatprep.subr.mxu0 0.0
          %547 = vmatpush1.msra.mxu0 %v504
          %548 = vmatprep.subr.mxu0 0.0
          %549 = vmatpush1.msra.mxu0 %v503
          %550 = vmatprep.subr.mxu0 0.0
          %551 = vmatpush2.msra.mxu0 0.0
          %552 = vmatprep.subr.mxu0 0.0
          %553 = vmatpush2.msra.mxu0 0.0
          %554 = vmatprep.subr.mxu0 0.0
          %555 = vmatpush2.msra.mxu0 0.0
          %556 = vmatprep.subr.mxu0 0.0
          %557 = vmatpush2.msra.mxu0 0.0
          %558 = vmatprep.subr.mxu0 0.0
          %559 = vmatpush2.msra.mxu0 0.0
          %560 = vmatprep.subr.mxu0 0.0
          %561 = vmatpush2.msra.mxu0 0.0
          %562 = vmatprep.subr.mxu0 0.0
          %563 = vmatpush2.msra.mxu0 0.0
          %564 = vmatprep.subr.mxu0 0.0
          %565 = vmatpush2.msra.mxu0 0.0
          %566 = vmatprep.subr.mxu0 0.0
          %567 = vmatpush2.msra.mxu0 0.0
          %568 = vmatprep.subr.mxu0 0.0
          %569 = vmatpush2.msra.mxu0 0.0
          %570 = vmatprep.subr.mxu0 0.0
          %571 = vmatpush2.msra.mxu0 0.0
          %572 = vmatprep.subr.mxu0 0.0
          %573 = vmatpush2.msra.mxu0 0.0
          %574 = vmatprep.subr.mxu0 0.0
          %575 = vmatpush2.msra.mxu0 0.0
          %576 = vmatprep.subr.mxu0 0.0
          %577 = vmatpush2.msra.mxu0 0.0
          %578 = vmatprep.subr.mxu0 0.0
          %579 = vmatpush2.msra.mxu0 0.0
          %580 = vmatprep.subr.mxu0 0.0
          %581 = vmatpush2.msra.mxu0 0.0
          %582 = vmatprep.mubr.f32.mxu0 0.0
          %583 = vmatmul.mubr.f32.gmra.mxu0 %v516
          %v584 = vpop.f32.mrf.mxu0
          %v585 = vadd.f32 %v512, %v584
          %v586 = vpop.f32.mrf.mxu0
          %587 = vdwg.mxu0
          %588 = vst [vmem:[%s490] sm:$0xff] %v585
        $region80: #{tpu_custom_call.1} parent=55 // pred_fallthru
          _
        %v589 = vld [vmem:[%s430] sm:$0xff]
        %v590 = vld [vmem:[#allocation10] sm:$0xff]
        %v591 = vld [vmem:[#allocation10 + $0x8] sm:$0xff]
        %v592 = vld [vmem:[#allocation10 + $0x10] sm:$0xff]
        %v593 = vld [vmem:[#allocation10 + $0x18] sm:$0xff]
        %v594 = vld [vmem:[%s6] sm:$0x1]
        %v596 = vlaneseq
        %v597 = vshrl.u32 %v596, 7
        %v598 = vsub.s32 0, %v597
        %v599 = vrot.slane %v594, %v598
        %vm601 = vcmask 261120
        %v603 = vsel %vm601, %v589, 0
        %605 = vmatprep.subr.mxu0 0.0
        %606 = vmatpush1.msra.mxu0 0.0
        %607 = vmatprep.subr.mxu0 0.0
        %608 = vmatpush1.msra.mxu0 0.0
        %609 = vmatprep.subr.mxu0 0.0
        %610 = vmatpush1.msra.mxu0 0.0
        %611 = vmatprep.subr.mxu0 0.0
        %612 = vmatpush1.msra.mxu0 0.0
        %613 = vmatprep.subr.mxu0 0.0
        %614 = vmatpush1.msra.mxu0 0.0
        %615 = vmatprep.subr.mxu0 0.0
        %616 = vmatpush1.msra.mxu0 0.0
        %617 = vmatprep.subr.mxu0 0.0
        %618 = vmatpush1.msra.mxu0 0.0
        %619 = vmatprep.subr.mxu0 0.0
        %620 = vmatpush1.msra.mxu0 0.0
        %621 = vmatprep.subr.mxu0 0.0
        %622 = vmatpush1.msra.mxu0 0.0
        %623 = vmatprep.subr.mxu0 0.0
        %624 = vmatpush1.msra.mxu0 0.0
        %625 = vmatprep.subr.mxu0 0.0
        %626 = vmatpush1.msra.mxu0 0.0
        %627 = vmatprep.subr.mxu0 0.0
        %628 = vmatpush1.msra.mxu0 0.0
        %629 = vmatprep.subr.mxu0 0.0
        %630 = vmatpush1.msra.mxu0 %v593
        %631 = vmatprep.subr.mxu0 0.0
        %632 = vmatpush1.msra.mxu0 %v592
        %633 = vmatprep.subr.mxu0 0.0
        %634 = vmatpush1.msra.mxu0 %v591
        %635 = vmatprep.subr.mxu0 0.0
        %636 = vmatpush1.msra.mxu0 %v590
        %637 = vmatprep.subr.mxu0 0.0
        %638 = vmatpush2.msra.mxu0 0.0
        %639 = vmatprep.subr.mxu0 0.0
        %640 = vmatpush2.msra.mxu0 0.0
        %641 = vmatprep.subr.mxu0 0.0
        %642 = vmatpush2.msra.mxu0 0.0
        %643 = vmatprep.subr.mxu0 0.0
        %644 = vmatpush2.msra.mxu0 0.0
        %645 = vmatprep.subr.mxu0 0.0
        %646 = vmatpush2.msra.mxu0 0.0
        %647 = vmatprep.subr.mxu0 0.0
        %648 = vmatpush2.msra.mxu0 0.0
        %649 = vmatprep.subr.mxu0 0.0
        %650 = vmatpush2.msra.mxu0 0.0
        %651 = vmatprep.subr.mxu0 0.0
        %652 = vmatpush2.msra.mxu0 0.0
        %653 = vmatprep.subr.mxu0 0.0
        %654 = vmatpush2.msra.mxu0 0.0
        %655 = vmatprep.subr.mxu0 0.0
        %656 = vmatpush2.msra.mxu0 0.0
        %657 = vmatprep.subr.mxu0 0.0
        %658 = vmatpush2.msra.mxu0 0.0
        %659 = vmatprep.subr.mxu0 0.0
        %660 = vmatpush2.msra.mxu0 0.0
        %661 = vmatprep.subr.mxu0 0.0
        %662 = vmatpush2.msra.mxu0 0.0
        %663 = vmatprep.subr.mxu0 0.0
        %664 = vmatpush2.msra.mxu0 0.0
        %665 = vmatprep.subr.mxu0 0.0
        %666 = vmatpush2.msra.mxu0 0.0
        %667 = vmatprep.subr.mxu0 0.0
        %668 = vmatpush2.msra.mxu0 0.0
        %669 = vmatprep.mubr.f32.mxu0 0.0
        %670 = vmatmul.mubr.f32.gmra.mxu0 %v603
        %v671 = vpop.f32.mrf.mxu0
        %v672 = vadd.f32 %v599, %v671
        %v673 = vpop.f32.mrf.mxu0
        %674 = vdwg.mxu0
        %675 = vst.msk [vmem:[#allocation2] sm:$0xff] %vm601, %v672
        %v676 = vld [vmem:[%s439] sm:$0xff]
        %v677 = vld [vmem:[#allocation12] sm:$0xff]
        %v678 = vld [vmem:[#allocation12 + $0x8] sm:$0xff]
        %v679 = vld [vmem:[#allocation12 + $0x10] sm:$0xff]
        %v680 = vld [vmem:[#allocation12 + $0x18] sm:$0xff]
        %v682 = vsel %vm601, %v676, 0
        %684 = vmatprep.subr.mxu0 0.0
        %685 = vmatpush1.msra.mxu0 0.0
        %686 = vmatprep.subr.mxu0 0.0
        %687 = vmatpush1.msra.mxu0 0.0
        %688 = vmatprep.subr.mxu0 0.0
        %689 = vmatpush1.msra.mxu0 0.0
        %690 = vmatprep.subr.mxu0 0.0
        %691 = vmatpush1.msra.mxu0 0.0
        %692 = vmatprep.subr.mxu0 0.0
        %693 = vmatpush1.msra.mxu0 0.0
        %694 = vmatprep.subr.mxu0 0.0
        %695 = vmatpush1.msra.mxu0 0.0
        %696 = vmatprep.subr.mxu0 0.0
        %697 = vmatpush1.msra.mxu0 0.0
        %698 = vmatprep.subr.mxu0 0.0
        %699 = vmatpush1.msra.mxu0 0.0
        %700 = vmatprep.subr.mxu0 0.0
        %701 = vmatpush1.msra.mxu0 0.0
        %702 = vmatprep.subr.mxu0 0.0
        %703 = vmatpush1.msra.mxu0 0.0
        %704 = vmatprep.subr.mxu0 0.0
        %705 = vmatpush1.msra.mxu0 0.0
        %706 = vmatprep.subr.mxu0 0.0
        %707 = vmatpush1.msra.mxu0 0.0
        %708 = vmatprep.subr.mxu0 0.0
        %709 = vmatpush1.msra.mxu0 %v680
        %710 = vmatprep.subr.mxu0 0.0
        %711 = vmatpush1.msra.mxu0 %v679
        %712 = vmatprep.subr.mxu0 0.0
        %713 = vmatpush1.msra.mxu0 %v678
        %714 = vmatprep.subr.mxu0 0.0
        %715 = vmatpush1.msra.mxu0 %v677
        %716 = vmatprep.subr.mxu0 0.0
        %717 = vmatpush2.msra.mxu0 0.0
        %718 = vmatprep.subr.mxu0 0.0
        %719 = vmatpush2.msra.mxu0 0.0
        %720 = vmatprep.subr.mxu0 0.0
        %721 = vmatpush2.msra.mxu0 0.0
        %722 = vmatprep.subr.mxu0 0.0
        %723 = vmatpush2.msra.mxu0 0.0
        %724 = vmatprep.subr.mxu0 0.0
        %725 = vmatpush2.msra.mxu0 0.0
        %726 = vmatprep.subr.mxu0 0.0
        %727 = vmatpush2.msra.mxu0 0.0
        %728 = vmatprep.subr.mxu0 0.0
        %729 = vmatpush2.msra.mxu0 0.0
        %730 = vmatprep.subr.mxu0 0.0
        %731 = vmatpush2.msra.mxu0 0.0
        %732 = vmatprep.subr.mxu0 0.0
        %733 = vmatpush2.msra.mxu0 0.0
        %734 = vmatprep.subr.mxu0 0.0
        %735 = vmatpush2.msra.mxu0 0.0
        %736 = vmatprep.subr.mxu0 0.0
        %737 = vmatpush2.msra.mxu0 0.0
        %738 = vmatprep.subr.mxu0 0.0
        %739 = vmatpush2.msra.mxu0 0.0
        %740 = vmatprep.subr.mxu0 0.0
        %741 = vmatpush2.msra.mxu0 0.0
        %742 = vmatprep.subr.mxu0 0.0
        %743 = vmatpush2.msra.mxu0 0.0
        %744 = vmatprep.subr.mxu0 0.0
        %745 = vmatpush2.msra.mxu0 0.0
        %746 = vmatprep.subr.mxu0 0.0
        %747 = vmatpush2.msra.mxu0 0.0
        %748 = vmatprep.mubr.f32.mxu0 0.0
        %749 = vmatmul.mubr.f32.gmra.mxu0 %v682
        %v750 = vpop.f32.mrf.mxu0
        %v751 = vadd.f32 0.0, %v750
        %v752 = vpop.f32.mrf.mxu0
        %753 = vdwg.mxu0
        %s754 = sld [smem:[#allocation3]]
        %v755 = vld [vmem:[%s7] sm:$0x1]
        %v757 = vlaneseq
        %v758 = vshrl.u32 %v757, 7
        %v759 = vsub.s32 0, %v758
        %v760 = vrot.slane %v755, %v759
        %v762 = vld [vmem:[#allocation2] sm:$0x1]
        %v763 = vlaneseq
        %v764 = vshrl.u32 %v763, 7
        %v765 = vsub.s32 0, %v764
        %v766 = vrot.slane %v762, %v765
        %v767 = vadd.f32 %v751, %v766
        %v768 = vmax.f32 %v767, 0.0
        %v769 = vmul.f32 %v768, %v760
        %v770 = vsel %vm601, %v769, 0.0
        %771 = vadd.xlane.f32.xlu0 %v770
        %v772 = vpop.xlane.xlu0 %771
        %v773 = vadd.f32 %v772, 0.0
        %v774 = vstv %s754
        %v775 = vadd.f32 %v773, %v774
        %v777 = vlaneseq
        %v778 = vand.u32 %v777, 127
        %v779 = vlaneseq
        %v780 = vshrl.u32 %v779, 7
        %v781 = vsub.s32 %v778, %v780
        %v782 = vrot.slane %v775, %v781
        %vm784 = vcmask 57344
        %785 = vst.msk [vmem:[%s497] sm:$0x1] %vm784, %v782
        %v786 = vld [vmem:[#allocation2 + $0x1] sm:$0x1]
        %v787 = vlaneseq
        %v788 = vshrl.u32 %v787, 7
        %v789 = vsub.s32 0, %v788
        %v790 = vrot.slane %v786, %v789
        %v791 = vadd.f32 %v751, %v790
        %v792 = vmax.f32 %v791, 0.0
        %v793 = vmul.f32 %v792, %v760
        %v794 = vsel %vm601, %v793, 0.0
        %795 = vadd.xlane.f32.xlu0 %v794
        %v796 = vpop.xlane.xlu0 %795
        %v797 = vadd.f32 %v796, 0.0
        %v798 = vadd.f32 %v797, %v774
        %v800 = vlaneseq
        %v801 = vshrl.u32 %v800, 7
        %v802 = vsub.s32 %v778, %v801
        %v803 = vrot.slane %v798, %v802
        %805 = vst.msk [vmem:[%s497 + $0x1] sm:$0x1] %vm784, %v803
        %v806 = vld [vmem:[#allocation2 + $0x2] sm:$0x1]
        %v807 = vlaneseq
        %v808 = vshrl.u32 %v807, 7
        %v809 = vsub.s32 0, %v808
        %v810 = vrot.slane %v806, %v809
        %v811 = vadd.f32 %v751, %v810
        %v812 = vmax.f32 %v811, 0.0
        %v813 = vmul.f32 %v812, %v760
        %v814 = vsel %vm601, %v813, 0.0
        %815 = vadd.xlane.f32.xlu0 %v814
        %v816 = vpop.xlane.xlu0 %815
        %v817 = vadd.f32 %v816, 0.0
        %v818 = vadd.f32 %v817, %v774
        %v820 = vlaneseq
        %v821 = vshrl.u32 %v820, 7
        %v822 = vsub.s32 %v778, %v821
        %v823 = vrot.slane %v818, %v822
        %825 = vst.msk [vmem:[%s497 + $0x2] sm:$0x1] %vm784, %v823
        %v826 = vld [vmem:[#allocation2 + $0x3] sm:$0x1]
        %v827 = vlaneseq
        %v828 = vshrl.u32 %v827, 7
        %v829 = vsub.s32 0, %v828
        %v830 = vrot.slane %v826, %v829
        %v831 = vadd.f32 %v751, %v830
        %v832 = vmax.f32 %v831, 0.0
        %v833 = vmul.f32 %v832, %v760
        %v834 = vsel %vm601, %v833, 0.0
        %835 = vadd.xlane.f32.xlu0 %v834
        %v836 = vpop.xlane.xlu0 %835
        %v837 = vadd.f32 %v836, 0.0
        %v838 = vadd.f32 %v837, %v774
        %v840 = vlaneseq
        %v841 = vshrl.u32 %v840, 7
        %v842 = vsub.s32 %v778, %v841
        %v843 = vrot.slane %v838, %v842
        %845 = vst.msk [vmem:[%s497 + $0x3] sm:$0x1] %vm784, %v843
        %v846 = vld [vmem:[#allocation2 + $0x4] sm:$0x1]
        %v847 = vlaneseq
        %v848 = vshrl.u32 %v847, 7
        %v849 = vsub.s32 0, %v848
        %v850 = vrot.slane %v846, %v849
        %v851 = vadd.f32 %v751, %v850
        %v852 = vmax.f32 %v851, 0.0
        %v853 = vmul.f32 %v852, %v760
        %v854 = vsel %vm601, %v853, 0.0
        %855 = vadd.xlane.f32.xlu0 %v854
        %v856 = vpop.xlane.xlu0 %855
        %v857 = vadd.f32 %v856, 0.0
        %v858 = vadd.f32 %v857, %v774
        %v860 = vlaneseq
        %v861 = vshrl.u32 %v860, 7
        %v862 = vsub.s32 %v778, %v861
        %v863 = vrot.slane %v858, %v862
        %865 = vst.msk [vmem:[%s497 + $0x4] sm:$0x1] %vm784, %v863
        %v866 = vld [vmem:[#allocation2 + $0x5] sm:$0x1]
        %v867 = vlaneseq
        %v868 = vshrl.u32 %v867, 7
        %v869 = vsub.s32 0, %v868
        %v870 = vrot.slane %v866, %v869
        %v871 = vadd.f32 %v751, %v870
        %v872 = vmax.f32 %v871, 0.0
        %v873 = vmul.f32 %v872, %v760
        %v874 = vsel %vm601, %v873, 0.0
        %875 = vadd.xlane.f32.xlu0 %v874
        %v876 = vpop.xlane.xlu0 %875
        %v877 = vadd.f32 %v876, 0.0
        %v878 = vadd.f32 %v877, %v774
        %v880 = vlaneseq
        %v881 = vshrl.u32 %v880, 7
        %v882 = vsub.s32 %v778, %v881
        %v883 = vrot.slane %v878, %v882
        %885 = vst.msk [vmem:[%s497 + $0x5] sm:$0x1] %vm784, %v883
        %v886 = vld [vmem:[#allocation2 + $0x6] sm:$0x1]
        %v887 = vlaneseq
        %v888 = vshrl.u32 %v887, 7
        %v889 = vsub.s32 0, %v888
        %v890 = vrot.slane %v886, %v889
        %v891 = vadd.f32 %v751, %v890
        %v892 = vmax.f32 %v891, 0.0
        %v893 = vmul.f32 %v892, %v760
        %v894 = vsel %vm601, %v893, 0.0
        %895 = vadd.xlane.f32.xlu0 %v894
        %v896 = vpop.xlane.xlu0 %895
        %v897 = vadd.f32 %v896, 0.0
        %v898 = vadd.f32 %v897, %v774
        %v900 = vlaneseq
        %v901 = vshrl.u32 %v900, 7
        %v902 = vsub.s32 %v778, %v901
        %v903 = vrot.slane %v898, %v902
        %905 = vst.msk [vmem:[%s497 + $0x6] sm:$0x1] %vm784, %v903
        %v906 = vld [vmem:[#allocation2 + $0x7] sm:$0x1]
        %v907 = vlaneseq
        %v908 = vshrl.u32 %v907, 7
        %v909 = vsub.s32 0, %v908
        %v910 = vrot.slane %v906, %v909
        %v911 = vadd.f32 %v751, %v910
        %v912 = vmax.f32 %v911, 0.0
        %v913 = vmul.f32 %v912, %v760
        %v914 = vsel %vm601, %v913, 0.0
        %915 = vadd.xlane.f32.xlu0 %v914
        %v916 = vpop.xlane.xlu0 %915
        %v917 = vadd.f32 %v916, 0.0
        %v918 = vadd.f32 %v917, %v774
        %v920 = vlaneseq
        %v921 = vshrl.u32 %v920, 7
        %v922 = vsub.s32 %v778, %v921
        %v923 = vrot.slane %v918, %v922
        %925 = vst.msk [vmem:[%s497 + $0x7] sm:$0x1] %vm784, %v923
        %s926 = sand.u32 %s268, 1
        %s927 = scalar_lea.sflag [#allocation6], %s926
        %s928 = sand.u32 %s268, 1
        %s929 = smul.addr %s928, 8
        %s930 = scalar_lea.vmem [#allocation13], %s929
        %s931 = sand.u32 %s298, 1
        %s932 = scalar_lea.sflag [#allocation15], %s931
        %s933 = sand.u32 %s298, 1
        %s934 = smul.addr %s933, 8
        %s935 = scalar_lea.vmem [#allocation14], %s934
        // Predicated region
        $region81: #{tpu_custom_call.1} parent=55 // pred_check
          %p936 = pneg %p278
        $region82: #{tpu_custom_call.1} parent=55 // pred_check_branch
          %938 = sbr.rel (%p936) target = $region84
        $region83: #{tpu_custom_call.1} parent=55 // pred_region
          %s940 = ssub.s32 128, 128
          %941 = vsyncadd %s927, %s940
          %s942 = sadd.s32 %s42, %s41
          %s943 = smul.addr %s942, 128
          %s944 = scalar_lea.hbm %s9, %s943
          %s946 = sshll.u32 %s930, 4
          %s947 = int_to_ptr.vmem [resolvable:$true] %s946
          %949 = dma.vmem_to_hbm [thread:$0]  %s947, 128, %s944, %s927
        $region84: #{tpu_custom_call.1} parent=55 // pred_fallthru
          _
        // Predicated region
        $region85: #{tpu_custom_call.1} parent=55 // pred_check
          %p950 = pneg %p308
        $region86: #{tpu_custom_call.1} parent=55 // pred_check_branch
          %952 = sbr.rel (%p950) target = $region88
        $region87: #{tpu_custom_call.1} parent=55 // pred_region
          %s954 = ssub.s32 128, 128
          %955 = vsyncadd %s932, %s954
          %s956 = sadd.s32 %s43, %s42
          %s957 = sadd.s32 %s956, %s41
          %s958 = smul.addr %s957, 128
          %s959 = scalar_lea.hbm %s10, %s958
          %s961 = sshll.u32 %s935, 4
          %s962 = int_to_ptr.vmem [resolvable:$true] %s961
          %964 = dma.vmem_to_hbm [thread:$0]  %s962, 128, %s959, %s932
        $region88: #{tpu_custom_call.1} parent=55 // pred_fallthru
          _
      $region56: #{tpu_custom_call.1} parent=5 // pred_fallthru
        _
      %p965 = scmp.le.s32.totalorder 2, %s31
      // Predicated region
      $region89: #{tpu_custom_call.1} parent=5 // pred_check
        %p966 = pneg %p965
      $region90: #{tpu_custom_call.1} parent=5 // pred_check_branch
        %968 = sbr.rel (%p966) target = $region92
      $region91: #{tpu_custom_call.1} parent=5 // pred_region
        %s969 = ssub.s32 %s31, 2
        // Predicated region
        $region93: #{tpu_custom_call.1} parent=91 // pred_check
          %p970 = pneg %p284
        $region94: #{tpu_custom_call.1} parent=91 // pred_check_branch
          %972 = sbr.rel (%p970) target = $region96
        $region95: #{tpu_custom_call.1} parent=91 // pred_region
          %s973 = sand.u32 %s269, 1
          %s974 = scalar_lea.sflag [#allocation6], %s973
          %s975 = sand.u32 %s269, 1
          %s976 = smul.addr %s975, 8
          %s977 = scalar_lea.vmem [#allocation13], %s976
          %978 = dma.done %s974, 128
        $region96: #{tpu_custom_call.1} parent=91 // pred_fallthru
          _
        // Predicated region
        $region97: #{tpu_custom_call.1} parent=91 // pred_check
          %p979 = pneg %p314
        $region98: #{tpu_custom_call.1} parent=91 // pred_check_branch
          %981 = sbr.rel (%p979) target = $region100
        $region99: #{tpu_custom_call.1} parent=91 // pred_region
          %s982 = sand.u32 %s299, 1
          %s983 = scalar_lea.sflag [#allocation15], %s982
          %s984 = sand.u32 %s299, 1
          %s985 = smul.addr %s984, 8
          %s986 = scalar_lea.vmem [#allocation14], %s985
          %987 = dma.done %s983, 128
        $region100: #{tpu_custom_call.1} parent=91 // pred_fallthru
          _
      $region92: #{tpu_custom_call.1} parent=5 // pred_fallthru
        _
    $region6: #{tpu_custom_call.1} parent=1 // loop_footer
      %s35 = sadd.s32 1, %s31
    $region7: #{tpu_custom_call.1} parent=1 // loop_footer_branch
      %30 = sbr.rel target = $region3
    $region8: #{tpu_custom_call.1} parent=1 // loop_exit
      _
    %988 = vsyncpa [#allocation5], 1
    %s989 = scalar_lea.sflag [#allocation5], 1
    %990 = vsyncpa %s989, 1
    %991 = vsyncpa [#allocation8], 1
    %s992 = scalar_lea.sflag [#allocation8], 1
    %993 = vsyncpa %s992, 1
    %994 = vsyncpa [#allocation11], 1
    %995 = vsyncpa [#allocation6], 1
    %s996 = scalar_lea.sflag [#allocation6], 1
    %997 = vsyncpa %s996, 1
    %998 = vsyncpa [#allocation15], 1
    %s999 = scalar_lea.sflag [#allocation15], 1
    %1000 = vsyncpa %s999, 1

</llo_original>
